<compile_context>
chip_gen: v7x
topology: tpu7x:2x2x1
jax: 0.10.0
libtpu: 0.0.40
codegen_flags: <defaults>
</compile_context>

<pallas_src>
import functools

import jax
import jax.numpy as jnp
from jax.experimental import pallas as pl
from jax.experimental.pallas import tpu as pltpu


# ----------------------------- fused Pallas kernel ----------------------------
def _cgan_fused_kernel(
    x_ref,       # (Mp, d)        bf16   flattened real images (row-padded to 16)
    y_ref,       # (Mp, d)        bf16   flattened conditioning images (row-padded)
    gyw1_ref,    # (d, 2*hidden)  bf16   [ G.w1 | D.w1_yhalf ]  (column-concatenated)
    gb1_ref,     # (1, hidden)    f32    G layer-1 bias
    gw2_ref,     # (hidden, d)    bf16   G layer-2 weight
    gb2_ref,     # (1, d)         f32    G layer-2 bias
    dw1x_ref,    # (d, hidden)    bf16   D layer-1 weight, x rows
    db1_ref,     # (1, hidden)    f32    D layer-1 bias
    dw2_ref,     # (1, hidden)    f32    D layer-2 weight (transposed)
    db2_ref,     # (1, 1)         f32    D layer-2 bias
    real_out_ref,  # (Mp, 1) f32  critic scores for real images
    fake_out_ref,  # (Mp, 1) f32  critic scores for generated images
    *,
    hidden,
):
    f32 = jnp.float32
    bf16 = jnp.bfloat16

    x = x_ref[...]                                   # (Mp, d) bf16
    y = y_ref[...]                                   # (Mp, d) bf16

    # --- fused layer-1 matmul: G.w1 and D.w1(y-half) share the y LHS (N = 2*hidden
    #     fills the 256-wide MXU on v6e/v7x; on v5e it still halves y-LHS streaming).
    yw = jnp.dot(y, gyw1_ref[...], preferred_element_type=f32)   # (Mp, 2*hidden) f32
    # hidden % 128 == 0 -> both column slices land on lane-tile boundaries (no relayout).
    g_pre = yw[:, :hidden] + gb1_ref[...]                        # (Mp, hidden)
    dy_bias = yw[:, hidden:] + db1_ref[...]                      # (Mp, hidden), computed ONCE

    # --- generator: leaky_relu(0.2) -> Linear -> tanh   (f32 epilogue: v5e-safe)
    h_g = jnp.where(g_pre > 0.0, g_pre, 0.2 * g_pre)             # (Mp, hidden) f32
    xfake = jnp.tanh(
        jnp.dot(h_g.astype(bf16), gw2_ref[...], preferred_element_type=f32)
        + gb2_ref[...]
    )                                                            # (Mp, d) f32

    # --- critic layer 1: two dots sharing the resident dw1x RHS (no axis-0 concat,
    #     no VMEM copy of a stacked batch, no duplicated dy_part).
    dw1x = dw1x_ref[...]
    d_real = jnp.dot(x, dw1x, preferred_element_type=f32) + dy_bias              # (Mp, hidden)
    d_fake = jnp.dot(xfake.astype(bf16), dw1x, preferred_element_type=f32) + dy_bias

    h_real = jnp.where(d_real > 0.0, d_real, 0.2 * d_real)
    h_fake = jnp.where(d_fake > 0.0, d_fake, 0.2 * d_fake)

    # --- critic layer 2: elementwise multiply + lane reduce (VPU + XLU, no narrow
    #     matmul); write the two score halves directly to their own outputs.
    w2 = dw2_ref[...]                                            # (1, hidden) f32
    b2 = db2_ref[...]                                            # (1, 1) f32
    real_out_ref[...] = (jnp.sum(h_real * w2, axis=-1, keepdims=True) + b2).astype(real_out_ref.dtype)
    fake_out_ref[...] = (jnp.sum(h_fake * w2, axis=-1, keepdims=True) + b2).astype(fake_out_ref.dtype)


def _run_fused_forward(params, x_flat, y_flat, hidden):
    """x_flat, y_flat: (Mp, d) bf16 with Mp % 16 == 0. Returns two (Mp, 1) f32 score arrays."""
    mp, d = x_flat.shape
    kernel = functools.partial(_cgan_fused_kernel, hidden=hidden)

    # Gridless call: every operand is a whole-array VMEM block -> single invocation,
    # no double-buffering, no pipeline prologue/epilogue. (~1 MiB of bf16 weights +
    # ~64 KiB activations fits comfortably in scoped VMEM on v5e/v6e/v7x.)
    vmem = pl.BlockSpec(memory_space=pltpu.MemorySpace.VMEM)
    return pl.pallas_call(
        kernel,
        out_shape=(
            jax.ShapeDtypeStruct((mp, 1), jnp.float32),   # real scores
            jax.ShapeDtypeStruct((mp, 1), jnp.float32),   # fake scores
        ),
        in_specs=[vmem] * 10,
        out_specs=(vmem, vmem),
    )(
        x_flat, y_flat,
        params["gyw1"], params["gb1"], params["gw2"], params["gb2"],
        params["dw1x"], params["db1"], params["dw2"], params["db2"],
    )


# --------------------------- parameter construction --------------------------
def init_params(key, c, h, w, hidden):
    """Deterministic N(0, 0.02) weight init (typical GAN initializer), zero biases.

    Weights are stored bf16 (MXU-native, halves HBM weight traffic); biases stay f32.
    G.w1 and the y-half of D.w1 are stored column-concatenated so layer 1 runs as a
    single 2*hidden-wide matmul in the fused kernel.
    """
    assert hidden % 128 == 0, "hidden must be a multiple of 128 (lane-tile-aligned column split)"
    d = c * h * w
    ks = jax.random.split(key, 4)
    std = 0.02
    g_w1 = jax.random.normal(ks[0], (d, hidden), jnp.float32) * std
    g_w2 = jax.random.normal(ks[1], (hidden, d), jnp.float32) * std
    d_w1 = jax.random.normal(ks[2], (2 * d, hidden), jnp.float32) * std  # rows: [x; y]
    d_w2 = jax.random.normal(ks[3], (hidden, 1), jnp.float32) * std

    d_w1x = d_w1[:d, :]
    d_w1y = d_w1[d:, :]

    return {
        "gyw1": jnp.concatenate([g_w1, d_w1y], axis=1).astype(jnp.bfloat16),  # (d, 2*hidden)
        "gb1": jnp.zeros((1, hidden), jnp.float32),
        "gw2": g_w2.astype(jnp.bfloat16),                                     # (hidden, d)
        "gb2": jnp.zeros((1, d), jnp.float32),
        "dw1x": d_w1x.astype(jnp.bfloat16),                                   # (d, hidden)
        "db1": jnp.zeros((1, hidden), jnp.float32),
        "dw2": d_w2.reshape(1, hidden).astype(jnp.float32),                   # (1, hidden)
        "db2": jnp.zeros((1, 1), jnp.float32),
    }


# ------------------------------- model forward --------------------------------
def cgan_forward(params, xreal, y, hidden):
    """Matches CGANModel.forward: returns (y_real, y_fake) = (D(xreal,y), D(G(y),y))."""
    n, c, h, w = xreal.shape
    d = c * h * w

    # Pad the batch to a multiple of 16 (bf16 packs 16 sublanes per vreg); padded rows
    # are computed but discarded.
    mp = max(16, ((n + 15) // 16) * 16)
    x_flat = xreal.reshape(n, d).astype(jnp.bfloat16)
    y_flat = y.reshape(n, d).astype(jnp.bfloat16)
    pad = mp - n
    if pad:
        x_flat = jnp.pad(x_flat, ((0, pad), (0, 0)))
        y_flat = jnp.pad(y_flat, ((0, pad), (0, 0)))

    s_real, s_fake = _run_fused_forward(params, x_flat, y_flat, hidden)  # (mp, 1) each
    return s_real[:n], s_fake[:n]


# ---------------------------------- main --------------------------------------
if __name__ == "__main__":
    key = jax.random.PRNGKey(0)
    k_param, k_x, k_y = jax.random.split(key, 3)

    # Small shapes: batch=2, channels=4, spatial=16x16, hidden=128
    N, C, H, W = 2, 4, 16, 16
    HIDDEN = 128

    params = init_params(k_param, C, H, W, HIDDEN)
    xreal = jax.random.normal(k_x, (N, C, H, W), jnp.float32)
    y = jax.random.normal(k_y, (N, C, H, W), jnp.float32)

    fwd = jax.jit(functools.partial(cgan_forward, hidden=HIDDEN))
    y_real, y_fake = fwd(params, xreal, y)
    jax.block_until_ready((y_real, y_fake))

    assert y_real.shape == (N, 1) and y_fake.shape == (N, 1)
    assert y_real.dtype == jnp.float32 and y_fake.dtype == jnp.float32
    assert bool(jnp.all(jnp.isfinite(y_real))) and bool(jnp.all(jnp.isfinite(y_fake)))
    print("KERNEL_OK")
</pallas_src>

<mosaic_0001>
module attributes {stable_mosaic.version = 11 : i64} {
  func.func @_cgan_fused_kernel(%arg0: memref<16x1024xbf16, #tpu.memory_space<vmem>>, %arg1: memref<16x1024xbf16, #tpu.memory_space<vmem>>, %arg2: memref<1024x256xbf16, #tpu.memory_space<vmem>>, %arg3: memref<1x128xf32, #tpu.memory_space<vmem>>, %arg4: memref<128x1024xbf16, #tpu.memory_space<vmem>>, %arg5: memref<1x1024xf32, #tpu.memory_space<vmem>>, %arg6: memref<1024x128xbf16, #tpu.memory_space<vmem>>, %arg7: memref<1x128xf32, #tpu.memory_space<vmem>>, %arg8: memref<1x128xf32, #tpu.memory_space<vmem>>, %arg9: memref<1x1xf32, #tpu.memory_space<vmem>>, %arg10: memref<16x1xf32, #tpu.memory_space<vmem>>, %arg11: memref<16x1xf32, #tpu.memory_space<vmem>>) attributes {dimension_semantics = [], scalar_prefetch = 0 : i64, scratch_operands = 0 : i64, tpu.core_type = #tpu.core_type<tc>} {
    %c0 = arith.constant 0 : index
    %c0_0 = arith.constant 0 : index
    %0 = vector.load %arg0[%c0, %c0_0] : memref<16x1024xbf16, #tpu.memory_space<vmem>>, vector<16x1024xbf16>
    %c0_1 = arith.constant 0 : index
    %c0_2 = arith.constant 0 : index
    %1 = vector.load %arg1[%c0_1, %c0_2] : memref<16x1024xbf16, #tpu.memory_space<vmem>>, vector<16x1024xbf16>
    %c0_3 = arith.constant 0 : index
    %c0_4 = arith.constant 0 : index
    %2 = vector.load %arg2[%c0_3, %c0_4] : memref<1024x256xbf16, #tpu.memory_space<vmem>>, vector<1024x256xbf16>
    %cst = arith.constant dense<0.000000e+00> : vector<16x256xf32>
    %3 = tpu.matmul %1, %2, %cst {dimension_numbers = #tpu.dot_dimension_numbers<[1], [0], [0], [1], [0, 0, 1, 1], [], []>} : vector<16x1024xbf16>, vector<1024x256xbf16>, vector<16x256xf32> -> vector<16x256xf32>
    %4 = vector.extract_strided_slice %3 {offsets = [0, 0], sizes = [16, 128], strides = [1, 1]} : vector<16x256xf32> to vector<16x128xf32>
    %c0_5 = arith.constant 0 : index
    %c0_6 = arith.constant 0 : index
    %5 = vector.load %arg3[%c0_5, %c0_6] : memref<1x128xf32, #tpu.memory_space<vmem>>, vector<1x128xf32>
    %6 = vector.broadcast %5 : vector<1x128xf32> to vector<16x128xf32>
    %7 = arith.addf %4, %6 : vector<16x128xf32>
    %8 = vector.extract_strided_slice %3 {offsets = [0, 128], sizes = [16, 128], strides = [1, 1]} : vector<16x256xf32> to vector<16x128xf32>
    %c0_7 = arith.constant 0 : index
    %c0_8 = arith.constant 0 : index
    %9 = vector.load %arg7[%c0_7, %c0_8] : memref<1x128xf32, #tpu.memory_space<vmem>>, vector<1x128xf32>
    %10 = vector.broadcast %9 : vector<1x128xf32> to vector<16x128xf32>
    %11 = arith.addf %8, %10 : vector<16x128xf32>
    %cst_9 = arith.constant 0.000000e+00 : f32
    %12 = vector.broadcast %cst_9 : f32 to vector<16x128xf32>
    %13 = arith.cmpf ogt, %7, %12 : vector<16x128xf32>
    %cst_10 = arith.constant 2.000000e-01 : f32
    %14 = vector.broadcast %cst_10 : f32 to vector<16x128xf32>
    %15 = arith.mulf %14, %7 : vector<16x128xf32>
    %16 = arith.select %13, %7, %15 : vector<16x128xi1>, vector<16x128xf32>
    %17 = arith.truncf %16 : vector<16x128xf32> to vector<16x128xbf16>
    %c0_11 = arith.constant 0 : index
    %c0_12 = arith.constant 0 : index
    %18 = vector.load %arg4[%c0_11, %c0_12] : memref<128x1024xbf16, #tpu.memory_space<vmem>>, vector<128x1024xbf16>
    %cst_13 = arith.constant dense<0.000000e+00> : vector<16x1024xf32>
    %19 = tpu.matmul %17, %18, %cst_13 {dimension_numbers = #tpu.dot_dimension_numbers<[1], [0], [0], [1], [0, 0, 1, 1], [], []>} : vector<16x128xbf16>, vector<128x1024xbf16>, vector<16x1024xf32> -> vector<16x1024xf32>
    %c0_14 = arith.constant 0 : index
    %c0_15 = arith.constant 0 : index
    %20 = vector.load %arg5[%c0_14, %c0_15] : memref<1x1024xf32, #tpu.memory_space<vmem>>, vector<1x1024xf32>
    %21 = vector.broadcast %20 : vector<1x1024xf32> to vector<16x1024xf32>
    %22 = arith.addf %19, %21 : vector<16x1024xf32>
    %23 = math.tanh %22 : vector<16x1024xf32>
    %c0_16 = arith.constant 0 : index
    %c0_17 = arith.constant 0 : index
    %24 = vector.load %arg6[%c0_16, %c0_17] : memref<1024x128xbf16, #tpu.memory_space<vmem>>, vector<1024x128xbf16>
    %cst_18 = arith.constant dense<0.000000e+00> : vector<16x128xf32>
    %25 = tpu.matmul %0, %24, %cst_18 {dimension_numbers = #tpu.dot_dimension_numbers<[1], [0], [0], [1], [0, 0, 1, 1], [], []>} : vector<16x1024xbf16>, vector<1024x128xbf16>, vector<16x128xf32> -> vector<16x128xf32>
    %26 = arith.addf %25, %11 : vector<16x128xf32>
    %27 = arith.truncf %23 : vector<16x1024xf32> to vector<16x1024xbf16>
    %cst_19 = arith.constant dense<0.000000e+00> : vector<16x128xf32>
    %28 = tpu.matmul %27, %24, %cst_19 {dimension_numbers = #tpu.dot_dimension_numbers<[1], [0], [0], [1], [0, 0, 1, 1], [], []>} : vector<16x1024xbf16>, vector<1024x128xbf16>, vector<16x128xf32> -> vector<16x128xf32>
    %29 = arith.addf %28, %11 : vector<16x128xf32>
    %cst_20 = arith.constant 0.000000e+00 : f32
    %30 = vector.broadcast %cst_20 : f32 to vector<16x128xf32>
    %31 = arith.cmpf ogt, %26, %30 : vector<16x128xf32>
    %cst_21 = arith.constant 2.000000e-01 : f32
    %32 = vector.broadcast %cst_21 : f32 to vector<16x128xf32>
    %33 = arith.mulf %32, %26 : vector<16x128xf32>
    %34 = arith.select %31, %26, %33 : vector<16x128xi1>, vector<16x128xf32>
    %cst_22 = arith.constant 0.000000e+00 : f32
    %35 = vector.broadcast %cst_22 : f32 to vector<16x128xf32>
    %36 = arith.cmpf ogt, %29, %35 : vector<16x128xf32>
    %cst_23 = arith.constant 2.000000e-01 : f32
    %37 = vector.broadcast %cst_23 : f32 to vector<16x128xf32>
    %38 = arith.mulf %37, %29 : vector<16x128xf32>
    %39 = arith.select %36, %29, %38 : vector<16x128xi1>, vector<16x128xf32>
    %c0_24 = arith.constant 0 : index
    %c0_25 = arith.constant 0 : index
    %40 = vector.load %arg8[%c0_24, %c0_25] : memref<1x128xf32, #tpu.memory_space<vmem>>, vector<1x128xf32>
    %c0_26 = arith.constant 0 : index
    %c0_27 = arith.constant 0 : index
    %41 = vector.load %arg9[%c0_26, %c0_27] : memref<1x1xf32, #tpu.memory_space<vmem>>, vector<1x1xf32>
    %42 = vector.broadcast %40 : vector<1x128xf32> to vector<16x128xf32>
    %43 = arith.mulf %34, %42 : vector<16x128xf32>
    %cst_28 = arith.constant dense<0.000000e+00> : vector<16xf32>
    %44 = vector.multi_reduction <add>, %43, %cst_28 [1] : vector<16x128xf32> to vector<16xf32>
    %45 = vector.shape_cast %44 : vector<16xf32> to vector<16x1xf32>
    %46 = vector.broadcast %41 : vector<1x1xf32> to vector<16x1xf32>
    %47 = arith.addf %45, %46 : vector<16x1xf32>
    %c0_29 = arith.constant 0 : index
    %c0_30 = arith.constant 0 : index
    %48 = vector.load %arg10[%c0_29, %c0_30] : memref<16x1xf32, #tpu.memory_space<vmem>>, vector<16x1xf32>
    tpu.vector_store %arg10[%c0_29, %c0_30], %47 {strides = array<i32>} : memref<16x1xf32, #tpu.memory_space<vmem>>, vector<16x1xf32>,
    %49 = vector.broadcast %40 : vector<1x128xf32> to vector<16x128xf32>
    %50 = arith.mulf %39, %49 : vector<16x128xf32>
    %cst_31 = arith.constant dense<0.000000e+00> : vector<16xf32>
    %51 = vector.multi_reduction <add>, %50, %cst_31 [1] : vector<16x128xf32> to vector<16xf32>
    %52 = vector.shape_cast %51 : vector<16xf32> to vector<16x1xf32>
    %53 = vector.broadcast %41 : vector<1x1xf32> to vector<16x1xf32>
    %54 = arith.addf %52, %53 : vector<16x1xf32>
    %c0_32 = arith.constant 0 : index
    %c0_33 = arith.constant 0 : index
    %55 = vector.load %arg11[%c0_32, %c0_33] : memref<16x1xf32, #tpu.memory_space<vmem>>, vector<16x1xf32>
    tpu.vector_store %arg11[%c0_32, %c0_33], %54 {strides = array<i32>} : memref<16x1xf32, #tpu.memory_space<vmem>>, vector<16x1xf32>,
    return
  }
}

</mosaic_0001>

<llo_original>
// kernel: cgan_forward.1
$region0: #{cgan_forward.1}
  #allocation0 [shape = 'u32[]', space=smem, size = 0x4, offset = 0x4, fixed_abs, tag = 'smem constant byte address 0x4 - core index']
  #allocation1 [shape = 'u32[144,128]{1,0:T(1,128)}', space=vmem, size = 0x12000, scoped, tag = 'internal scratch']
  #allocation2 [shape = 'f32[1,1]{1,0:T(1,128)S(1)}', space=vmem, size = 0x200, scoped, tag = 'scoped memory for cgan_forward.1']
  %s0 = inlined_call_operand.vmem [shape: bf16[16,1024], index: 0, kind: input, shape index: {}]
  %s1 = inlined_call_operand.vmem [shape: bf16[16,1024], index: 1, kind: input, shape index: {}]
  %s2 = inlined_call_operand.hbm [shape: bf16[1024,256], index: 2, kind: input, shape index: {}]
  %s3 = inlined_call_operand.vmem [shape: f32[1,128], index: 3, kind: input, shape index: {}]
  %s4 = inlined_call_operand.vmem [shape: bf16[128,1024], index: 4, kind: input, shape index: {}]
  %s5 = inlined_call_operand.vmem [shape: f32[1,1024], index: 5, kind: input, shape index: {}]
  %s6 = inlined_call_operand.hbm [shape: bf16[1024,128], index: 6, kind: input, shape index: {}]
  %s7 = inlined_call_operand.vmem [shape: f32[1,128], index: 7, kind: input, shape index: {}]
  %s8 = inlined_call_operand.vmem [shape: f32[1,128], index: 8, kind: input, shape index: {}]
  %s9 = inlined_call_operand.<no memory space> [shape: f32[1,1], index: 9, kind: input, shape index: {}]
  %s10 = inlined_call_operand.vmem [shape: f32[16,1], index: 10, kind: output, shape index: {0}]
  %s11 = inlined_call_operand.vmem [shape: f32[16,1], index: 11, kind: output, shape index: {1}]
  %12 = xla_tuple %s10, %s11
  %s13 = sld [smem:[#allocation0]]
  $region66: #{cgan_forward.1} parent=0
    _
  %s15 = ssub.s32 1, %s13
  %s16 = scalar_select 0, %s15, %s13
  %v17 = vstv %s9
  %18 = vst [vmem:[#allocation2] sm:$0x1] %v17
  $region1: #{cgan_forward.1} parent=0
    #allocation3 [shape = 'u8[524288]{0}', space=vmem, size = 0x80000, scoped, tag = 'input window, operand 2, single buffered']
    #allocation4 [shape = 's32[1]{0}', space=sflag, size = 0x4, scoped, tag = 'scoped memory for cgan_forward.1']
    #allocation5 [shape = 'u8[262144]{0}', space=vmem, size = 0x40000, scoped, tag = 'input window, operand 6, single buffered']
    #allocation6 [shape = 's32[1]{0}', space=sflag, size = 0x4, scoped, tag = 'scoped memory for cgan_forward.1']
    %19 = vsyncpa [#allocation4], 0
    %20 = vsyncpa [#allocation6], 0
    // Predicated region
    $region2: #{cgan_forward.1} parent=1 // pred_check
      _
    $region3: #{cgan_forward.1} parent=1 // pred_check_branch
      %22 = sbr.rel (0) target = $region5
    $region4: #{cgan_forward.1} parent=1 // pred_region
      _
    $region5: #{cgan_forward.1} parent=1 // pred_fallthru
      _
    // Predicated region
    $region6: #{cgan_forward.1} parent=1 // pred_check
      _
    $region7: #{cgan_forward.1} parent=1 // pred_check_branch
      %24 = sbr.rel (0) target = $region9
    $region8: #{cgan_forward.1} parent=1 // pred_region
      _
    $region9: #{cgan_forward.1} parent=1 // pred_fallthru
      _
    // Predicated region
    $region10: #{cgan_forward.1} parent=1 // pred_check
      _
    $region11: #{cgan_forward.1} parent=1 // pred_check_branch
      %26 = sbr.rel (0) target = $region13
    $region12: #{cgan_forward.1} parent=1 // pred_region
      %s28 = ssub.s32 16384, 16384
      %29 = vsyncadd [#allocation4], %s28
      %s30 = sshll.u32 [#allocation3], 4
      %s31 = int_to_ptr.vmem [resolvable:$true] %s30
      %36 = dma.hbm_to_vmem [thread:$0]  %s2, 16384, %s31, [#allocation4], 128, 128, 8
    $region13: #{cgan_forward.1} parent=1 // pred_fallthru
      _
    // Predicated region
    $region14: #{cgan_forward.1} parent=1 // pred_check
      _
    $region15: #{cgan_forward.1} parent=1 // pred_check_branch
      %38 = sbr.rel (0) target = $region17
    $region16: #{cgan_forward.1} parent=1 // pred_region
      _
    $region17: #{cgan_forward.1} parent=1 // pred_fallthru
      _
    // Predicated region
    $region18: #{cgan_forward.1} parent=1 // pred_check
      _
    $region19: #{cgan_forward.1} parent=1 // pred_check_branch
      %40 = sbr.rel (0) target = $region21
    $region20: #{cgan_forward.1} parent=1 // pred_region
      _
    $region21: #{cgan_forward.1} parent=1 // pred_fallthru
      _
    // Predicated region
    $region22: #{cgan_forward.1} parent=1 // pred_check
      _
    $region23: #{cgan_forward.1} parent=1 // pred_check_branch
      %42 = sbr.rel (0) target = $region25
    $region24: #{cgan_forward.1} parent=1 // pred_region
      _
    $region25: #{cgan_forward.1} parent=1 // pred_fallthru
      _
    // Predicated region
    $region26: #{cgan_forward.1} parent=1 // pred_check
      _
    $region27: #{cgan_forward.1} parent=1 // pred_check_branch
      %44 = sbr.rel (0) target = $region29
    $region28: #{cgan_forward.1} parent=1 // pred_region
      %s46 = ssub.s32 8192, 8192
      %47 = vsyncadd [#allocation6], %s46
      %s48 = sshll.u32 [#allocation5], 4
      %s49 = int_to_ptr.vmem [resolvable:$true] %s48
      %54 = dma.hbm_to_vmem [thread:$0]  %s6, 8192, %s49, [#allocation6], 64, 64, 4
    $region29: #{cgan_forward.1} parent=1 // pred_fallthru
      _
    // Predicated region
    $region30: #{cgan_forward.1} parent=1 // pred_check
      _
    $region31: #{cgan_forward.1} parent=1 // pred_check_branch
      %56 = sbr.rel (0) target = $region33
    $region32: #{cgan_forward.1} parent=1 // pred_region
      _
    $region33: #{cgan_forward.1} parent=1 // pred_fallthru
      _
    // Predicated region
    $region34: #{cgan_forward.1} parent=1 // pred_check
      _
    $region35: #{cgan_forward.1} parent=1 // pred_check_branch
      %58 = sbr.rel (0) target = $region37
    $region36: #{cgan_forward.1} parent=1 // pred_region
      _
    $region37: #{cgan_forward.1} parent=1 // pred_fallthru
      _
    // Predicated region
    $region38: #{cgan_forward.1} parent=1 // pred_check
      _
    $region39: #{cgan_forward.1} parent=1 // pred_check_branch
      %60 = sbr.rel (0) target = $region41
    $region40: #{cgan_forward.1} parent=1 // pred_region
      _
    $region41: #{cgan_forward.1} parent=1 // pred_fallthru
      _
    // Predicated region
    $region42: #{cgan_forward.1} parent=1 // pred_check
      _
    $region43: #{cgan_forward.1} parent=1 // pred_check_branch
      %62 = sbr.rel (0) target = $region45
    $region44: #{cgan_forward.1} parent=1 // pred_region
      %63 = dma.done [#allocation4], 16384
    $region45: #{cgan_forward.1} parent=1 // pred_fallthru
      _
    // Predicated region
    $region46: #{cgan_forward.1} parent=1 // pred_check
      _
    $region47: #{cgan_forward.1} parent=1 // pred_check_branch
      %65 = sbr.rel (0) target = $region49
    $region48: #{cgan_forward.1} parent=1 // pred_region
      %66 = dma.done [#allocation6], 8192
    $region49: #{cgan_forward.1} parent=1 // pred_fallthru
      _
    %v68 = vld [vmem:[%s0] sm:$0xff]
    %v69 = vld [vmem:[%s0 + $0x8] sm:$0xff]
    %v70 = vld [vmem:[%s0 + $0x10] sm:$0xff]
    %v71 = vld [vmem:[%s0 + $0x18] sm:$0xff]
    %v72 = vld [vmem:[%s0 + $0x20] sm:$0xff]
    %v73 = vld [vmem:[%s0 + $0x28] sm:$0xff]
    %v74 = vld [vmem:[%s0 + $0x30] sm:$0xff]
    %v75 = vld [vmem:[%s0 + $0x38] sm:$0xff]
    %v76 = vld [vmem:[%s1] sm:$0xff]
    %v77 = vld [vmem:[%s1 + $0x8] sm:$0xff]
    %v78 = vld [vmem:[%s1 + $0x10] sm:$0xff]
    %v79 = vld [vmem:[%s1 + $0x18] sm:$0xff]
    %v80 = vld [vmem:[%s1 + $0x20] sm:$0xff]
    %v81 = vld [vmem:[%s1 + $0x28] sm:$0xff]
    %v82 = vld [vmem:[%s1 + $0x30] sm:$0xff]
    %v83 = vld [vmem:[%s1 + $0x38] sm:$0xff]
    %v84 = vld [vmem:[#allocation3] sm:$0xff]
    %v85 = vld [vmem:[#allocation3 + $0x8] sm:$0xff]
    %v86 = vld [vmem:[#allocation3 + $0x10] sm:$0xff]
    %v87 = vld [vmem:[#allocation3 + $0x18] sm:$0xff]
    %v88 = vld [vmem:[#allocation3 + $0x20] sm:$0xff]
    %v89 = vld [vmem:[#allocation3 + $0x28] sm:$0xff]
    %v90 = vld [vmem:[#allocation3 + $0x30] sm:$0xff]
    %v91 = vld [vmem:[#allocation3 + $0x38] sm:$0xff]
    %v92 = vld [vmem:[#allocation3 + $0x40] sm:$0xff]
    %v93 = vld [vmem:[#allocation3 + $0x48] sm:$0xff]
    %v94 = vld [vmem:[#allocation3 + $0x50] sm:$0xff]
    %v95 = vld [vmem:[#allocation3 + $0x58] sm:$0xff]
    %v96 = vld [vmem:[#allocation3 + $0x60] sm:$0xff]
    %v97 = vld [vmem:[#allocation3 + $0x68] sm:$0xff]
    %v98 = vld [vmem:[#allocation3 + $0x70] sm:$0xff]
    %v99 = vld [vmem:[#allocation3 + $0x78] sm:$0xff]
    %v100 = vld [vmem:[#allocation3 + $0x80] sm:$0xff]
    %v101 = vld [vmem:[#allocation3 + $0x88] sm:$0xff]
    %v102 = vld [vmem:[#allocation3 + $0x90] sm:$0xff]
    %v103 = vld [vmem:[#allocation3 + $0x98] sm:$0xff]
    %v104 = vld [vmem:[#allocation3 + $0xa0] sm:$0xff]
    %v105 = vld [vmem:[#allocation3 + $0xa8] sm:$0xff]
    %v106 = vld [vmem:[#allocation3 + $0xb0] sm:$0xff]
    %v107 = vld [vmem:[#allocation3 + $0xb8] sm:$0xff]
    %v108 = vld [vmem:[#allocation3 + $0xc0] sm:$0xff]
    %v109 = vld [vmem:[#allocation3 + $0xc8] sm:$0xff]
    %v110 = vld [vmem:[#allocation3 + $0xd0] sm:$0xff]
    %v111 = vld [vmem:[#allocation3 + $0xd8] sm:$0xff]
    %v112 = vld [vmem:[#allocation3 + $0xe0] sm:$0xff]
    %v113 = vld [vmem:[#allocation3 + $0xe8] sm:$0xff]
    %v114 = vld [vmem:[#allocation3 + $0xf0] sm:$0xff]
    %v115 = vld [vmem:[#allocation3 + $0xf8] sm:$0xff]
    %v116 = vld [vmem:[#allocation3 + $0x100] sm:$0xff]
    %v117 = vld [vmem:[#allocation3 + $0x108] sm:$0xff]
    %v118 = vld [vmem:[#allocation3 + $0x110] sm:$0xff]
    %v119 = vld [vmem:[#allocation3 + $0x118] sm:$0xff]
    %v120 = vld [vmem:[#allocation3 + $0x120] sm:$0xff]
    %v121 = vld [vmem:[#allocation3 + $0x128] sm:$0xff]
    %v122 = vld [vmem:[#allocation3 + $0x130] sm:$0xff]
    %v123 = vld [vmem:[#allocation3 + $0x138] sm:$0xff]
    %v124 = vld [vmem:[#allocation3 + $0x140] sm:$0xff]
    %v125 = vld [vmem:[#allocation3 + $0x148] sm:$0xff]
    %v126 = vld [vmem:[#allocation3 + $0x150] sm:$0xff]
    %v127 = vld [vmem:[#allocation3 + $0x158] sm:$0xff]
    %v128 = vld [vmem:[#allocation3 + $0x160] sm:$0xff]
    %v129 = vld [vmem:[#allocation3 + $0x168] sm:$0xff]
    %v130 = vld [vmem:[#allocation3 + $0x170] sm:$0xff]
    %v131 = vld [vmem:[#allocation3 + $0x178] sm:$0xff]
    %v132 = vld [vmem:[#allocation3 + $0x180] sm:$0xff]
    %v133 = vld [vmem:[#allocation3 + $0x188] sm:$0xff]
    %v134 = vld [vmem:[#allocation3 + $0x190] sm:$0xff]
    %v135 = vld [vmem:[#allocation3 + $0x198] sm:$0xff]
    %v136 = vld [vmem:[#allocation3 + $0x1a0] sm:$0xff]
    %v137 = vld [vmem:[#allocation3 + $0x1a8] sm:$0xff]
    %v138 = vld [vmem:[#allocation3 + $0x1b0] sm:$0xff]
    %v139 = vld [vmem:[#allocation3 + $0x1b8] sm:$0xff]
    %v140 = vld [vmem:[#allocation3 + $0x1c0] sm:$0xff]
    %v141 = vld [vmem:[#allocation3 + $0x1c8] sm:$0xff]
    %v142 = vld [vmem:[#allocation3 + $0x1d0] sm:$0xff]
    %v143 = vld [vmem:[#allocation3 + $0x1d8] sm:$0xff]
    %v144 = vld [vmem:[#allocation3 + $0x1e0] sm:$0xff]
    %v145 = vld [vmem:[#allocation3 + $0x1e8] sm:$0xff]
    %v146 = vld [vmem:[#allocation3 + $0x1f0] sm:$0xff]
    %v147 = vld [vmem:[#allocation3 + $0x1f8] sm:$0xff]
    %v148 = vld [vmem:[#allocation3 + $0x200] sm:$0xff]
    %v149 = vld [vmem:[#allocation3 + $0x208] sm:$0xff]
    %v150 = vld [vmem:[#allocation3 + $0x210] sm:$0xff]
    %v151 = vld [vmem:[#allocation3 + $0x218] sm:$0xff]
    %v152 = vld [vmem:[#allocation3 + $0x220] sm:$0xff]
    %v153 = vld [vmem:[#allocation3 + $0x228] sm:$0xff]
    %v154 = vld [vmem:[#allocation3 + $0x230] sm:$0xff]
    %v155 = vld [vmem:[#allocation3 + $0x238] sm:$0xff]
    %v156 = vld [vmem:[#allocation3 + $0x240] sm:$0xff]
    %v157 = vld [vmem:[#allocation3 + $0x248] sm:$0xff]
    %v158 = vld [vmem:[#allocation3 + $0x250] sm:$0xff]
    %v159 = vld [vmem:[#allocation3 + $0x258] sm:$0xff]
    %v160 = vld [vmem:[#allocation3 + $0x260] sm:$0xff]
    %v161 = vld [vmem:[#allocation3 + $0x268] sm:$0xff]
    %v162 = vld [vmem:[#allocation3 + $0x270] sm:$0xff]
    %v163 = vld [vmem:[#allocation3 + $0x278] sm:$0xff]
    %v164 = vld [vmem:[#allocation3 + $0x280] sm:$0xff]
    %v165 = vld [vmem:[#allocation3 + $0x288] sm:$0xff]
    %v166 = vld [vmem:[#allocation3 + $0x290] sm:$0xff]
    %v167 = vld [vmem:[#allocation3 + $0x298] sm:$0xff]
    %v168 = vld [vmem:[#allocation3 + $0x2a0] sm:$0xff]
    %v169 = vld [vmem:[#allocation3 + $0x2a8] sm:$0xff]
    %v170 = vld [vmem:[#allocation3 + $0x2b0] sm:$0xff]
    %v171 = vld [vmem:[#allocation3 + $0x2b8] sm:$0xff]
    %v172 = vld [vmem:[#allocation3 + $0x2c0] sm:$0xff]
    %v173 = vld [vmem:[#allocation3 + $0x2c8] sm:$0xff]
    %v174 = vld [vmem:[#allocation3 + $0x2d0] sm:$0xff]
    %v175 = vld [vmem:[#allocation3 + $0x2d8] sm:$0xff]
    %v176 = vld [vmem:[#allocation3 + $0x2e0] sm:$0xff]
    %v177 = vld [vmem:[#allocation3 + $0x2e8] sm:$0xff]
    %v178 = vld [vmem:[#allocation3 + $0x2f0] sm:$0xff]
    %v179 = vld [vmem:[#allocation3 + $0x2f8] sm:$0xff]
    %v180 = vld [vmem:[#allocation3 + $0x300] sm:$0xff]
    %v181 = vld [vmem:[#allocation3 + $0x308] sm:$0xff]
    %v182 = vld [vmem:[#allocation3 + $0x310] sm:$0xff]
    %v183 = vld [vmem:[#allocation3 + $0x318] sm:$0xff]
    %v184 = vld [vmem:[#allocation3 + $0x320] sm:$0xff]
    %v185 = vld [vmem:[#allocation3 + $0x328] sm:$0xff]
    %v186 = vld [vmem:[#allocation3 + $0x330] sm:$0xff]
    %v187 = vld [vmem:[#allocation3 + $0x338] sm:$0xff]
    %v188 = vld [vmem:[#allocation3 + $0x340] sm:$0xff]
    %v189 = vld [vmem:[#allocation3 + $0x348] sm:$0xff]
    %v190 = vld [vmem:[#allocation3 + $0x350] sm:$0xff]
    %v191 = vld [vmem:[#allocation3 + $0x358] sm:$0xff]
    %v192 = vld [vmem:[#allocation3 + $0x360] sm:$0xff]
    %v193 = vld [vmem:[#allocation3 + $0x368] sm:$0xff]
    %v194 = vld [vmem:[#allocation3 + $0x370] sm:$0xff]
    %v195 = vld [vmem:[#allocation3 + $0x378] sm:$0xff]
    %v196 = vld [vmem:[#allocation3 + $0x380] sm:$0xff]
    %v197 = vld [vmem:[#allocation3 + $0x388] sm:$0xff]
    %v198 = vld [vmem:[#allocation3 + $0x390] sm:$0xff]
    %v199 = vld [vmem:[#allocation3 + $0x398] sm:$0xff]
    %v200 = vld [vmem:[#allocation3 + $0x3a0] sm:$0xff]
    %v201 = vld [vmem:[#allocation3 + $0x3a8] sm:$0xff]
    %v202 = vld [vmem:[#allocation3 + $0x3b0] sm:$0xff]
    %v203 = vld [vmem:[#allocation3 + $0x3b8] sm:$0xff]
    %v204 = vld [vmem:[#allocation3 + $0x3c0] sm:$0xff]
    %v205 = vld [vmem:[#allocation3 + $0x3c8] sm:$0xff]
    %v206 = vld [vmem:[#allocation3 + $0x3d0] sm:$0xff]
    %v207 = vld [vmem:[#allocation3 + $0x3d8] sm:$0xff]
    %v208 = vld [vmem:[#allocation3 + $0x3e0] sm:$0xff]
    %v209 = vld [vmem:[#allocation3 + $0x3e8] sm:$0xff]
    %v210 = vld [vmem:[#allocation3 + $0x3f0] sm:$0xff]
    %v211 = vld [vmem:[#allocation3 + $0x3f8] sm:$0xff]
    %v220 = vunpack.c.l.b16 %v76
    %v221 = vunpack.c.h.b16 %v76
    %v222 = vunpack.c.l.b16 %v77
    %v223 = vunpack.c.h.b16 %v77
    %v224 = vunpack.c.l.b16 %v78
    %v225 = vunpack.c.h.b16 %v78
    %v226 = vunpack.c.l.b16 %v79
    %v227 = vunpack.c.h.b16 %v79
    %v228 = vunpack.c.l.b16 %v80
    %v229 = vunpack.c.h.b16 %v80
    %v230 = vunpack.c.l.b16 %v81
    %v231 = vunpack.c.h.b16 %v81
    %v232 = vunpack.c.l.b16 %v82
    %v233 = vunpack.c.h.b16 %v82
    %v234 = vunpack.c.l.b16 %v83
    %v235 = vunpack.c.h.b16 %v83
    %v236 = vpack.c.b16 %v228, %v220
    %v237 = vpack.c.b16 %v229, %v221
    %v238 = vpack.c.b16 %v230, %v222
    %v239 = vpack.c.b16 %v231, %v223
    %v240 = vpack.c.b16 %v232, %v224
    %v241 = vpack.c.b16 %v233, %v225
    %v242 = vpack.c.b16 %v234, %v226
    %v243 = vpack.c.b16 %v235, %v227
    %v380 = vunpack.c.l.b16 %v84
    %v381 = vunpack.c.h.b16 %v84
    %v382 = vunpack.c.l.b16 %v85
    %v383 = vunpack.c.h.b16 %v85
    %v384 = vunpack.c.l.b16 %v86
    %v385 = vunpack.c.h.b16 %v86
    %v386 = vunpack.c.l.b16 %v87
    %v387 = vunpack.c.h.b16 %v87
    %v388 = vunpack.c.l.b16 %v88
    %v389 = vunpack.c.h.b16 %v88
    %v390 = vunpack.c.l.b16 %v89
    %v391 = vunpack.c.h.b16 %v89
    %v392 = vunpack.c.l.b16 %v90
    %v393 = vunpack.c.h.b16 %v90
    %v394 = vunpack.c.l.b16 %v91
    %v395 = vunpack.c.h.b16 %v91
    %v396 = vunpack.c.l.b16 %v92
    %v397 = vunpack.c.h.b16 %v92
    %v398 = vunpack.c.l.b16 %v93
    %v399 = vunpack.c.h.b16 %v93
    %v400 = vunpack.c.l.b16 %v94
    %v401 = vunpack.c.h.b16 %v94
    %v402 = vunpack.c.l.b16 %v95
    %v403 = vunpack.c.h.b16 %v95
    %v404 = vunpack.c.l.b16 %v96
    %v405 = vunpack.c.h.b16 %v96
    %v406 = vunpack.c.l.b16 %v97
    %v407 = vunpack.c.h.b16 %v97
    %v408 = vunpack.c.l.b16 %v98
    %v409 = vunpack.c.h.b16 %v98
    %v410 = vunpack.c.l.b16 %v99
    %v411 = vunpack.c.h.b16 %v99
    %v412 = vunpack.c.l.b16 %v100
    %v413 = vunpack.c.h.b16 %v100
    %v414 = vunpack.c.l.b16 %v101
    %v415 = vunpack.c.h.b16 %v101
    %v416 = vunpack.c.l.b16 %v102
    %v417 = vunpack.c.h.b16 %v102
    %v418 = vunpack.c.l.b16 %v103
    %v419 = vunpack.c.h.b16 %v103
    %v420 = vunpack.c.l.b16 %v104
    %v421 = vunpack.c.h.b16 %v104
    %v422 = vunpack.c.l.b16 %v105
    %v423 = vunpack.c.h.b16 %v105
    %v424 = vunpack.c.l.b16 %v106
    %v425 = vunpack.c.h.b16 %v106
    %v426 = vunpack.c.l.b16 %v107
    %v427 = vunpack.c.h.b16 %v107
    %v428 = vunpack.c.l.b16 %v108
    %v429 = vunpack.c.h.b16 %v108
    %v430 = vunpack.c.l.b16 %v109
    %v431 = vunpack.c.h.b16 %v109
    %v432 = vunpack.c.l.b16 %v110
    %v433 = vunpack.c.h.b16 %v110
    %v434 = vunpack.c.l.b16 %v111
    %v435 = vunpack.c.h.b16 %v111
    %v436 = vunpack.c.l.b16 %v112
    %v437 = vunpack.c.h.b16 %v112
    %v438 = vunpack.c.l.b16 %v113
    %v439 = vunpack.c.h.b16 %v113
    %v440 = vunpack.c.l.b16 %v114
    %v441 = vunpack.c.h.b16 %v114
    %v442 = vunpack.c.l.b16 %v115
    %v443 = vunpack.c.h.b16 %v115
    %v444 = vunpack.c.l.b16 %v116
    %v445 = vunpack.c.h.b16 %v116
    %v446 = vunpack.c.l.b16 %v117
    %v447 = vunpack.c.h.b16 %v117
    %v448 = vunpack.c.l.b16 %v118
    %v449 = vunpack.c.h.b16 %v118
    %v450 = vunpack.c.l.b16 %v119
    %v451 = vunpack.c.h.b16 %v119
    %v452 = vunpack.c.l.b16 %v120
    %v453 = vunpack.c.h.b16 %v120
    %v454 = vunpack.c.l.b16 %v121
    %v455 = vunpack.c.h.b16 %v121
    %v456 = vunpack.c.l.b16 %v122
    %v457 = vunpack.c.h.b16 %v122
    %v458 = vunpack.c.l.b16 %v123
    %v459 = vunpack.c.h.b16 %v123
    %v460 = vunpack.c.l.b16 %v124
    %v461 = vunpack.c.h.b16 %v124
    %v462 = vunpack.c.l.b16 %v125
    %v463 = vunpack.c.h.b16 %v125
    %v464 = vunpack.c.l.b16 %v126
    %v465 = vunpack.c.h.b16 %v126
    %v466 = vunpack.c.l.b16 %v127
    %v467 = vunpack.c.h.b16 %v127
    %v468 = vunpack.c.l.b16 %v128
    %v469 = vunpack.c.h.b16 %v128
    %v470 = vunpack.c.l.b16 %v129
    %v471 = vunpack.c.h.b16 %v129
    %v472 = vunpack.c.l.b16 %v130
    %v473 = vunpack.c.h.b16 %v130
    %v474 = vunpack.c.l.b16 %v131
    %v475 = vunpack.c.h.b16 %v131
    %v476 = vunpack.c.l.b16 %v132
    %v477 = vunpack.c.h.b16 %v132
    %v478 = vunpack.c.l.b16 %v133
    %v479 = vunpack.c.h.b16 %v133
    %v480 = vunpack.c.l.b16 %v134
    %v481 = vunpack.c.h.b16 %v134
    %v482 = vunpack.c.l.b16 %v135
    %v483 = vunpack.c.h.b16 %v135
    %v484 = vunpack.c.l.b16 %v136
    %v485 = vunpack.c.h.b16 %v136
    %v486 = vunpack.c.l.b16 %v137
    %v487 = vunpack.c.h.b16 %v137
    %v488 = vunpack.c.l.b16 %v138
    %v489 = vunpack.c.h.b16 %v138
    %v490 = vunpack.c.l.b16 %v139
    %v491 = vunpack.c.h.b16 %v139
    %v492 = vunpack.c.l.b16 %v140
    %v493 = vunpack.c.h.b16 %v140
    %v494 = vunpack.c.l.b16 %v141
    %v495 = vunpack.c.h.b16 %v141
    %v496 = vunpack.c.l.b16 %v142
    %v497 = vunpack.c.h.b16 %v142
    %v498 = vunpack.c.l.b16 %v143
    %v499 = vunpack.c.h.b16 %v143
    %v500 = vunpack.c.l.b16 %v144
    %v501 = vunpack.c.h.b16 %v144
    %v502 = vunpack.c.l.b16 %v145
    %v503 = vunpack.c.h.b16 %v145
    %v504 = vunpack.c.l.b16 %v146
    %v505 = vunpack.c.h.b16 %v146
    %v506 = vunpack.c.l.b16 %v147
    %v507 = vunpack.c.h.b16 %v147
    %v508 = vunpack.c.l.b16 %v148
    %v509 = vunpack.c.h.b16 %v148
    %v510 = vunpack.c.l.b16 %v149
    %v511 = vunpack.c.h.b16 %v149
    %v512 = vunpack.c.l.b16 %v150
    %v513 = vunpack.c.h.b16 %v150
    %v514 = vunpack.c.l.b16 %v151
    %v515 = vunpack.c.h.b16 %v151
    %v516 = vunpack.c.l.b16 %v152
    %v517 = vunpack.c.h.b16 %v152
    %v518 = vunpack.c.l.b16 %v153
    %v519 = vunpack.c.h.b16 %v153
    %v520 = vunpack.c.l.b16 %v154
    %v521 = vunpack.c.h.b16 %v154
    %v522 = vunpack.c.l.b16 %v155
    %v523 = vunpack.c.h.b16 %v155
    %v524 = vunpack.c.l.b16 %v156
    %v525 = vunpack.c.h.b16 %v156
    %v526 = vunpack.c.l.b16 %v157
    %v527 = vunpack.c.h.b16 %v157
    %v528 = vunpack.c.l.b16 %v158
    %v529 = vunpack.c.h.b16 %v158
    %v530 = vunpack.c.l.b16 %v159
    %v531 = vunpack.c.h.b16 %v159
    %v532 = vunpack.c.l.b16 %v160
    %v533 = vunpack.c.h.b16 %v160
    %v534 = vunpack.c.l.b16 %v161
    %v535 = vunpack.c.h.b16 %v161
    %v536 = vunpack.c.l.b16 %v162
    %v537 = vunpack.c.h.b16 %v162
    %v538 = vunpack.c.l.b16 %v163
    %v539 = vunpack.c.h.b16 %v163
    %v540 = vunpack.c.l.b16 %v164
    %v541 = vunpack.c.h.b16 %v164
    %v542 = vunpack.c.l.b16 %v165
    %v543 = vunpack.c.h.b16 %v165
    %v544 = vunpack.c.l.b16 %v166
    %v545 = vunpack.c.h.b16 %v166
    %v546 = vunpack.c.l.b16 %v167
    %v547 = vunpack.c.h.b16 %v167
    %v548 = vunpack.c.l.b16 %v168
    %v549 = vunpack.c.h.b16 %v168
    %v550 = vunpack.c.l.b16 %v169
    %v551 = vunpack.c.h.b16 %v169
    %v552 = vunpack.c.l.b16 %v170
    %v553 = vunpack.c.h.b16 %v170
    %v554 = vunpack.c.l.b16 %v171
    %v555 = vunpack.c.h.b16 %v171
    %v556 = vunpack.c.l.b16 %v172
    %v557 = vunpack.c.h.b16 %v172
    %v558 = vunpack.c.l.b16 %v173
    %v559 = vunpack.c.h.b16 %v173
    %v560 = vunpack.c.l.b16 %v174
    %v561 = vunpack.c.h.b16 %v174
    %v562 = vunpack.c.l.b16 %v175
    %v563 = vunpack.c.h.b16 %v175
    %v564 = vunpack.c.l.b16 %v176
    %v565 = vunpack.c.h.b16 %v176
    %v566 = vunpack.c.l.b16 %v177
    %v567 = vunpack.c.h.b16 %v177
    %v568 = vunpack.c.l.b16 %v178
    %v569 = vunpack.c.h.b16 %v178
    %v570 = vunpack.c.l.b16 %v179
    %v571 = vunpack.c.h.b16 %v179
    %v572 = vunpack.c.l.b16 %v180
    %v573 = vunpack.c.h.b16 %v180
    %v574 = vunpack.c.l.b16 %v181
    %v575 = vunpack.c.h.b16 %v181
    %v576 = vunpack.c.l.b16 %v182
    %v577 = vunpack.c.h.b16 %v182
    %v578 = vunpack.c.l.b16 %v183
    %v579 = vunpack.c.h.b16 %v183
    %v580 = vunpack.c.l.b16 %v184
    %v581 = vunpack.c.h.b16 %v184
    %v582 = vunpack.c.l.b16 %v185
    %v583 = vunpack.c.h.b16 %v185
    %v584 = vunpack.c.l.b16 %v186
    %v585 = vunpack.c.h.b16 %v186
    %v586 = vunpack.c.l.b16 %v187
    %v587 = vunpack.c.h.b16 %v187
    %v588 = vunpack.c.l.b16 %v188
    %v589 = vunpack.c.h.b16 %v188
    %v590 = vunpack.c.l.b16 %v189
    %v591 = vunpack.c.h.b16 %v189
    %v592 = vunpack.c.l.b16 %v190
    %v593 = vunpack.c.h.b16 %v190
    %v594 = vunpack.c.l.b16 %v191
    %v595 = vunpack.c.h.b16 %v191
    %v596 = vunpack.c.l.b16 %v192
    %v597 = vunpack.c.h.b16 %v192
    %v598 = vunpack.c.l.b16 %v193
    %v599 = vunpack.c.h.b16 %v193
    %v600 = vunpack.c.l.b16 %v194
    %v601 = vunpack.c.h.b16 %v194
    %v602 = vunpack.c.l.b16 %v195
    %v603 = vunpack.c.h.b16 %v195
    %v604 = vunpack.c.l.b16 %v196
    %v605 = vunpack.c.h.b16 %v196
    %v606 = vunpack.c.l.b16 %v197
    %v607 = vunpack.c.h.b16 %v197
    %v608 = vunpack.c.l.b16 %v198
    %v609 = vunpack.c.h.b16 %v198
    %v610 = vunpack.c.l.b16 %v199
    %v611 = vunpack.c.h.b16 %v199
    %v612 = vunpack.c.l.b16 %v200
    %v613 = vunpack.c.h.b16 %v200
    %v614 = vunpack.c.l.b16 %v201
    %v615 = vunpack.c.h.b16 %v201
    %v616 = vunpack.c.l.b16 %v202
    %v617 = vunpack.c.h.b16 %v202
    %v618 = vunpack.c.l.b16 %v203
    %v619 = vunpack.c.h.b16 %v203
    %v620 = vunpack.c.l.b16 %v204
    %v621 = vunpack.c.h.b16 %v204
    %v622 = vunpack.c.l.b16 %v205
    %v623 = vunpack.c.h.b16 %v205
    %v624 = vunpack.c.l.b16 %v206
    %v625 = vunpack.c.h.b16 %v206
    %v626 = vunpack.c.l.b16 %v207
    %v627 = vunpack.c.h.b16 %v207
    %v628 = vunpack.c.l.b16 %v208
    %v629 = vunpack.c.h.b16 %v208
    %v630 = vunpack.c.l.b16 %v209
    %v631 = vunpack.c.h.b16 %v209
    %v632 = vunpack.c.l.b16 %v210
    %v633 = vunpack.c.h.b16 %v210
    %v634 = vunpack.c.l.b16 %v211
    %v635 = vunpack.c.h.b16 %v211
    %v636 = vpack.c.b16 %v382, %v380
    %v637 = vpack.c.b16 %v383, %v381
    %v638 = vpack.c.b16 %v386, %v384
    %v639 = vpack.c.b16 %v387, %v385
    %v640 = vpack.c.b16 %v390, %v388
    %v641 = vpack.c.b16 %v391, %v389
    %v642 = vpack.c.b16 %v394, %v392
    %v643 = vpack.c.b16 %v395, %v393
    %v644 = vpack.c.b16 %v398, %v396
    %v645 = vpack.c.b16 %v399, %v397
    %v646 = vpack.c.b16 %v402, %v400
    %v647 = vpack.c.b16 %v403, %v401
    %v648 = vpack.c.b16 %v406, %v404
    %v649 = vpack.c.b16 %v407, %v405
    %v650 = vpack.c.b16 %v410, %v408
    %v651 = vpack.c.b16 %v411, %v409
    %v652 = vpack.c.b16 %v414, %v412
    %v653 = vpack.c.b16 %v415, %v413
    %v654 = vpack.c.b16 %v418, %v416
    %v655 = vpack.c.b16 %v419, %v417
    %v656 = vpack.c.b16 %v422, %v420
    %v657 = vpack.c.b16 %v423, %v421
    %v658 = vpack.c.b16 %v426, %v424
    %v659 = vpack.c.b16 %v427, %v425
    %v660 = vpack.c.b16 %v430, %v428
    %v661 = vpack.c.b16 %v431, %v429
    %v662 = vpack.c.b16 %v434, %v432
    %v663 = vpack.c.b16 %v435, %v433
    %v664 = vpack.c.b16 %v438, %v436
    %v665 = vpack.c.b16 %v439, %v437
    %v666 = vpack.c.b16 %v442, %v440
    %v667 = vpack.c.b16 %v443, %v441
    %v668 = vpack.c.b16 %v446, %v444
    %v669 = vpack.c.b16 %v447, %v445
    %v670 = vpack.c.b16 %v450, %v448
    %v671 = vpack.c.b16 %v451, %v449
    %v672 = vpack.c.b16 %v454, %v452
    %v673 = vpack.c.b16 %v455, %v453
    %v674 = vpack.c.b16 %v458, %v456
    %v675 = vpack.c.b16 %v459, %v457
    %v676 = vpack.c.b16 %v462, %v460
    %v677 = vpack.c.b16 %v463, %v461
    %v678 = vpack.c.b16 %v466, %v464
    %v679 = vpack.c.b16 %v467, %v465
    %v680 = vpack.c.b16 %v470, %v468
    %v681 = vpack.c.b16 %v471, %v469
    %v682 = vpack.c.b16 %v474, %v472
    %v683 = vpack.c.b16 %v475, %v473
    %v684 = vpack.c.b16 %v478, %v476
    %v685 = vpack.c.b16 %v479, %v477
    %v686 = vpack.c.b16 %v482, %v480
    %v687 = vpack.c.b16 %v483, %v481
    %v688 = vpack.c.b16 %v486, %v484
    %v689 = vpack.c.b16 %v487, %v485
    %v690 = vpack.c.b16 %v490, %v488
    %v691 = vpack.c.b16 %v491, %v489
    %v692 = vpack.c.b16 %v494, %v492
    %v693 = vpack.c.b16 %v495, %v493
    %v694 = vpack.c.b16 %v498, %v496
    %v695 = vpack.c.b16 %v499, %v497
    %v696 = vpack.c.b16 %v502, %v500
    %v697 = vpack.c.b16 %v503, %v501
    %v698 = vpack.c.b16 %v506, %v504
    %v699 = vpack.c.b16 %v507, %v505
    %v700 = vpack.c.b16 %v510, %v508
    %v701 = vpack.c.b16 %v511, %v509
    %v702 = vpack.c.b16 %v514, %v512
    %v703 = vpack.c.b16 %v515, %v513
    %v704 = vpack.c.b16 %v518, %v516
    %v705 = vpack.c.b16 %v519, %v517
    %v706 = vpack.c.b16 %v522, %v520
    %v707 = vpack.c.b16 %v523, %v521
    %v708 = vpack.c.b16 %v526, %v524
    %v709 = vpack.c.b16 %v527, %v525
    %v710 = vpack.c.b16 %v530, %v528
    %v711 = vpack.c.b16 %v531, %v529
    %v712 = vpack.c.b16 %v534, %v532
    %v713 = vpack.c.b16 %v535, %v533
    %v714 = vpack.c.b16 %v538, %v536
    %v715 = vpack.c.b16 %v539, %v537
    %v716 = vpack.c.b16 %v542, %v540
    %v717 = vpack.c.b16 %v543, %v541
    %v718 = vpack.c.b16 %v546, %v544
    %v719 = vpack.c.b16 %v547, %v545
    %v720 = vpack.c.b16 %v550, %v548
    %v721 = vpack.c.b16 %v551, %v549
    %v722 = vpack.c.b16 %v554, %v552
    %v723 = vpack.c.b16 %v555, %v553
    %v724 = vpack.c.b16 %v558, %v556
    %v725 = vpack.c.b16 %v559, %v557
    %v726 = vpack.c.b16 %v562, %v560
    %v727 = vpack.c.b16 %v563, %v561
    %v728 = vpack.c.b16 %v566, %v564
    %v729 = vpack.c.b16 %v567, %v565
    %v730 = vpack.c.b16 %v570, %v568
    %v731 = vpack.c.b16 %v571, %v569
    %v732 = vpack.c.b16 %v574, %v572
    %v733 = vpack.c.b16 %v575, %v573
    %v734 = vpack.c.b16 %v578, %v576
    %v735 = vpack.c.b16 %v579, %v577
    %v736 = vpack.c.b16 %v582, %v580
    %v737 = vpack.c.b16 %v583, %v581
    %v738 = vpack.c.b16 %v586, %v584
    %v739 = vpack.c.b16 %v587, %v585
    %v740 = vpack.c.b16 %v590, %v588
    %v741 = vpack.c.b16 %v591, %v589
    %v742 = vpack.c.b16 %v594, %v592
    %v743 = vpack.c.b16 %v595, %v593
    %v744 = vpack.c.b16 %v598, %v596
    %v745 = vpack.c.b16 %v599, %v597
    %v746 = vpack.c.b16 %v602, %v600
    %v747 = vpack.c.b16 %v603, %v601
    %v748 = vpack.c.b16 %v606, %v604
    %v749 = vpack.c.b16 %v607, %v605
    %v750 = vpack.c.b16 %v610, %v608
    %v751 = vpack.c.b16 %v611, %v609
    %v752 = vpack.c.b16 %v614, %v612
    %v753 = vpack.c.b16 %v615, %v613
    %v754 = vpack.c.b16 %v618, %v616
    %v755 = vpack.c.b16 %v619, %v617
    %v756 = vpack.c.b16 %v622, %v620
    %v757 = vpack.c.b16 %v623, %v621
    %v758 = vpack.c.b16 %v626, %v624
    %v759 = vpack.c.b16 %v627, %v625
    %v760 = vpack.c.b16 %v630, %v628
    %v761 = vpack.c.b16 %v631, %v629
    %v762 = vpack.c.b16 %v634, %v632
    %v763 = vpack.c.b16 %v635, %v633
    %892 = vmatprep.subr.bf16.mxu0 %v637
    %893 = vmatpush1.bf16.msra.mxu0 %v636
    %894 = vmatprep.subr.bf16.mxu0 %v639
    %895 = vmatpush1.bf16.msra.mxu0 %v638
    %896 = vmatprep.subr.bf16.mxu0 %v641
    %897 = vmatpush1.bf16.msra.mxu0 %v640
    %898 = vmatprep.subr.bf16.mxu0 %v643
    %899 = vmatpush1.bf16.msra.mxu0 %v642
    %900 = vmatprep.subr.bf16.mxu0 %v645
    %901 = vmatpush1.bf16.msra.mxu0 %v644
    %902 = vmatprep.subr.bf16.mxu0 %v647
    %903 = vmatpush1.bf16.msra.mxu0 %v646
    %904 = vmatprep.subr.bf16.mxu0 %v649
    %905 = vmatpush1.bf16.msra.mxu0 %v648
    %906 = vmatprep.subr.bf16.mxu0 %v651
    %907 = vmatpush1.bf16.msra.mxu0 %v650
    %908 = vmatprep.subr.bf16.mxu0 %v653
    %909 = vmatpush1.bf16.msra.mxu0 %v652
    %910 = vmatprep.subr.bf16.mxu0 %v655
    %911 = vmatpush1.bf16.msra.mxu0 %v654
    %912 = vmatprep.subr.bf16.mxu0 %v657
    %913 = vmatpush1.bf16.msra.mxu0 %v656
    %914 = vmatprep.subr.bf16.mxu0 %v659
    %915 = vmatpush1.bf16.msra.mxu0 %v658
    %916 = vmatprep.subr.bf16.mxu0 %v661
    %917 = vmatpush1.bf16.msra.mxu0 %v660
    %918 = vmatprep.subr.bf16.mxu0 %v663
    %919 = vmatpush1.bf16.msra.mxu0 %v662
    %920 = vmatprep.subr.bf16.mxu0 %v665
    %921 = vmatpush1.bf16.msra.mxu0 %v664
    %922 = vmatprep.subr.bf16.mxu0 %v667
    %923 = vmatpush1.bf16.msra.mxu0 %v666
    %924 = vmatprep.mubr.bf16.mxu0 %v237
    %925 = vmatmul.mubr.bf16.gmra.mrb[0].mxu0 %v236
    %v926 = vpop.f32.mrb[0].mxu0
    %v927 = vadd.f32 0.0, %v926
    %v928 = vpop.f32.mrb[0].mxu0
    %v929 = vadd.f32 0.0, %v928
    %v930 = vpop.f32.mrb[0].mxu0
    %v931 = vadd.f32 0.0, %v930
    %v932 = vpop.f32.mrb[0].mxu0
    %v933 = vadd.f32 0.0, %v932
    %934 = vdwg.mxu0
    %935 = vmatprep.subr.bf16.mxu0 %v669
    %936 = vmatpush1.bf16.msra.mxu0 %v668
    %937 = vmatprep.subr.bf16.mxu0 %v671
    %938 = vmatpush1.bf16.msra.mxu0 %v670
    %939 = vmatprep.subr.bf16.mxu0 %v673
    %940 = vmatpush1.bf16.msra.mxu0 %v672
    %941 = vmatprep.subr.bf16.mxu0 %v675
    %942 = vmatpush1.bf16.msra.mxu0 %v674
    %943 = vmatprep.subr.bf16.mxu0 %v677
    %944 = vmatpush1.bf16.msra.mxu0 %v676
    %945 = vmatprep.subr.bf16.mxu0 %v679
    %946 = vmatpush1.bf16.msra.mxu0 %v678
    %947 = vmatprep.subr.bf16.mxu0 %v681
    %948 = vmatpush1.bf16.msra.mxu0 %v680
    %949 = vmatprep.subr.bf16.mxu0 %v683
    %950 = vmatpush1.bf16.msra.mxu0 %v682
    %951 = vmatprep.subr.bf16.mxu0 %v685
    %952 = vmatpush1.bf16.msra.mxu0 %v684
    %953 = vmatprep.subr.bf16.mxu0 %v687
    %954 = vmatpush1.bf16.msra.mxu0 %v686
    %955 = vmatprep.subr.bf16.mxu0 %v689
    %956 = vmatpush1.bf16.msra.mxu0 %v688
    %957 = vmatprep.subr.bf16.mxu0 %v691
    %958 = vmatpush1.bf16.msra.mxu0 %v690
    %959 = vmatprep.subr.bf16.mxu0 %v693
    %960 = vmatpush1.bf16.msra.mxu0 %v692
    %961 = vmatprep.subr.bf16.mxu0 %v695
    %962 = vmatpush1.bf16.msra.mxu0 %v694
    %963 = vmatprep.subr.bf16.mxu0 %v697
    %964 = vmatpush1.bf16.msra.mxu0 %v696
    %965 = vmatprep.subr.bf16.mxu0 %v699
    %966 = vmatpush1.bf16.msra.mxu0 %v698
    %967 = vmatprep.mubr.bf16.mxu0 %v239
    %968 = vmatmul.mubr.bf16.gmra.mrb[0].mxu0 %v238
    %v969 = vpop.f32.mrb[0].mxu0
    %v970 = vadd.f32 %v927, %v969
    %v971 = vpop.f32.mrb[0].mxu0
    %v972 = vadd.f32 %v929, %v971
    %v973 = vpop.f32.mrb[0].mxu0
    %v974 = vadd.f32 %v931, %v973
    %v975 = vpop.f32.mrb[0].mxu0
    %v976 = vadd.f32 %v933, %v975
    %977 = vdwg.mxu0
    %978 = vmatprep.subr.bf16.mxu0 %v701
    %979 = vmatpush1.bf16.msra.mxu0 %v700
    %980 = vmatprep.subr.bf16.mxu0 %v703
    %981 = vmatpush1.bf16.msra.mxu0 %v702
    %982 = vmatprep.subr.bf16.mxu0 %v705
    %983 = vmatpush1.bf16.msra.mxu0 %v704
    %984 = vmatprep.subr.bf16.mxu0 %v707
    %985 = vmatpush1.bf16.msra.mxu0 %v706
    %986 = vmatprep.subr.bf16.mxu0 %v709
    %987 = vmatpush1.bf16.msra.mxu0 %v708
    %988 = vmatprep.subr.bf16.mxu0 %v711
    %989 = vmatpush1.bf16.msra.mxu0 %v710
    %990 = vmatprep.subr.bf16.mxu0 %v713
    %991 = vmatpush1.bf16.msra.mxu0 %v712
    %992 = vmatprep.subr.bf16.mxu0 %v715
    %993 = vmatpush1.bf16.msra.mxu0 %v714
    %994 = vmatprep.subr.bf16.mxu0 %v717
    %995 = vmatpush1.bf16.msra.mxu0 %v716
    %996 = vmatprep.subr.bf16.mxu0 %v719
    %997 = vmatpush1.bf16.msra.mxu0 %v718
    %998 = vmatprep.subr.bf16.mxu0 %v721
    %999 = vmatpush1.bf16.msra.mxu0 %v720
    %1000 = vmatprep.subr.bf16.mxu0 %v723
    %1001 = vmatpush1.bf16.msra.mxu0 %v722
    %1002 = vmatprep.subr.bf16.mxu0 %v725
    %1003 = vmatpush1.bf16.msra.mxu0 %v724
    %1004 = vmatprep.subr.bf16.mxu0 %v727
    %1005 = vmatpush1.bf16.msra.mxu0 %v726
    %1006 = vmatprep.subr.bf16.mxu0 %v729
    %1007 = vmatpush1.bf16.msra.mxu0 %v728
    %1008 = vmatprep.subr.bf16.mxu0 %v731
    %1009 = vmatpush1.bf16.msra.mxu0 %v730
    %1010 = vmatprep.mubr.bf16.mxu0 %v241
    %1011 = vmatmul.mubr.bf16.gmra.mrb[0].mxu0 %v240
    %v1012 = vpop.f32.mrb[0].mxu0
    %v1013 = vadd.f32 %v970, %v1012
    %v1014 = vpop.f32.mrb[0].mxu0
    %v1015 = vadd.f32 %v972, %v1014
    %v1016 = vpop.f32.mrb[0].mxu0
    %v1017 = vadd.f32 %v974, %v1016
    %v1018 = vpop.f32.mrb[0].mxu0
    %v1019 = vadd.f32 %v976, %v1018
    %1020 = vdwg.mxu0
    %1021 = vmatprep.subr.bf16.mxu0 %v733
    %1022 = vmatpush1.bf16.msra.mxu0 %v732
    %1023 = vmatprep.subr.bf16.mxu0 %v735
    %1024 = vmatpush1.bf16.msra.mxu0 %v734
    %1025 = vmatprep.subr.bf16.mxu0 %v737
    %1026 = vmatpush1.bf16.msra.mxu0 %v736
    %1027 = vmatprep.subr.bf16.mxu0 %v739
    %1028 = vmatpush1.bf16.msra.mxu0 %v738
    %1029 = vmatprep.subr.bf16.mxu0 %v741
    %1030 = vmatpush1.bf16.msra.mxu0 %v740
    %1031 = vmatprep.subr.bf16.mxu0 %v743
    %1032 = vmatpush1.bf16.msra.mxu0 %v742
    %1033 = vmatprep.subr.bf16.mxu0 %v745
    %1034 = vmatpush1.bf16.msra.mxu0 %v744
    %1035 = vmatprep.subr.bf16.mxu0 %v747
    %1036 = vmatpush1.bf16.msra.mxu0 %v746
    %1037 = vmatprep.subr.bf16.mxu0 %v749
    %1038 = vmatpush1.bf16.msra.mxu0 %v748
    %1039 = vmatprep.subr.bf16.mxu0 %v751
    %1040 = vmatpush1.bf16.msra.mxu0 %v750
    %1041 = vmatprep.subr.bf16.mxu0 %v753
    %1042 = vmatpush1.bf16.msra.mxu0 %v752
    %1043 = vmatprep.subr.bf16.mxu0 %v755
    %1044 = vmatpush1.bf16.msra.mxu0 %v754
    %1045 = vmatprep.subr.bf16.mxu0 %v757
    %1046 = vmatpush1.bf16.msra.mxu0 %v756
    %1047 = vmatprep.subr.bf16.mxu0 %v759
    %1048 = vmatpush1.bf16.msra.mxu0 %v758
    %1049 = vmatprep.subr.bf16.mxu0 %v761
    %1050 = vmatpush1.bf16.msra.mxu0 %v760
    %1051 = vmatprep.subr.bf16.mxu0 %v763
    %1052 = vmatpush1.bf16.msra.mxu0 %v762
    %1053 = vmatprep.mubr.bf16.mxu0 %v243
    %1054 = vmatmul.mubr.bf16.gmra.mrb[0].mxu0 %v242
    %v1055 = vpop.f32.mrb[0].mxu0
    %v1056 = vadd.f32 %v1013, %v1055
    %v1057 = vpop.f32.mrb[0].mxu0
    %v1058 = vadd.f32 %v1015, %v1057
    %v1059 = vpop.f32.mrb[0].mxu0
    %v1060 = vadd.f32 %v1017, %v1059
    %v1061 = vpop.f32.mrb[0].mxu0
    %v1062 = vadd.f32 %v1019, %v1061
    %1063 = vdwg.mxu0
    %v1064 = vld [vmem:[%s3] sm:$0x1]
    %v1066 = vlaneseq
    %v1067 = vshrl.u32 %v1066, 7
    %v1068 = vsub.s32 0, %v1067
    %v1069 = vrot.slane %v1064, %v1068
    %v1071 = vadd.f32 %v1056, %v1069
    %v1072 = vadd.f32 %v1060, %v1069
    %v1073 = vld [vmem:[%s7] sm:$0x1]
    %v1075 = vlaneseq
    %v1076 = vshrl.u32 %v1075, 7
    %v1077 = vsub.s32 0, %v1076
    %v1078 = vrot.slane %v1073, %v1077
    %v1080 = vadd.f32 %v1058, %v1078
    %v1081 = vadd.f32 %v1062, %v1078
    %vm1082 = vcmp.gt.f32.partialorder %v1071, 0.0
    %vm1083 = vcmp.gt.f32.partialorder %v1072, 0.0
    %v1084 = vmul.f32 %v1071, 0.2
    %v1085 = vmul.f32 %v1072, 0.2
    %v1086 = vsel %vm1082, %v1071, %v1084
    %v1087 = vsel %vm1083, %v1072, %v1085
    %v1088 = vpack.c.bf16 %v1087, %v1086
    %v1089 = vld [vmem:[%s4] sm:$0xff]
    %v1090 = vld [vmem:[%s4 + $0x8] sm:$0xff]
    %v1091 = vld [vmem:[%s4 + $0x10] sm:$0xff]
    %v1092 = vld [vmem:[%s4 + $0x18] sm:$0xff]
    %v1093 = vld [vmem:[%s4 + $0x20] sm:$0xff]
    %v1094 = vld [vmem:[%s4 + $0x28] sm:$0xff]
    %v1095 = vld [vmem:[%s4 + $0x30] sm:$0xff]
    %v1096 = vld [vmem:[%s4 + $0x38] sm:$0xff]
    %v1097 = vld [vmem:[%s4 + $0x40] sm:$0xff]
    %v1098 = vld [vmem:[%s4 + $0x48] sm:$0xff]
    %v1099 = vld [vmem:[%s4 + $0x50] sm:$0xff]
    %v1100 = vld [vmem:[%s4 + $0x58] sm:$0xff]
    %v1101 = vld [vmem:[%s4 + $0x60] sm:$0xff]
    %v1102 = vld [vmem:[%s4 + $0x68] sm:$0xff]
    %v1103 = vld [vmem:[%s4 + $0x70] sm:$0xff]
    %v1104 = vld [vmem:[%s4 + $0x78] sm:$0xff]
    %v1105 = vld [vmem:[%s4 + $0x80] sm:$0xff]
    %v1106 = vld [vmem:[%s4 + $0x88] sm:$0xff]
    %v1107 = vld [vmem:[%s4 + $0x90] sm:$0xff]
    %v1108 = vld [vmem:[%s4 + $0x98] sm:$0xff]
    %v1109 = vld [vmem:[%s4 + $0xa0] sm:$0xff]
    %v1110 = vld [vmem:[%s4 + $0xa8] sm:$0xff]
    %v1111 = vld [vmem:[%s4 + $0xb0] sm:$0xff]
    %v1112 = vld [vmem:[%s4 + $0xb8] sm:$0xff]
    %v1113 = vld [vmem:[%s4 + $0xc0] sm:$0xff]
    %v1114 = vld [vmem:[%s4 + $0xc8] sm:$0xff]
    %v1115 = vld [vmem:[%s4 + $0xd0] sm:$0xff]
    %v1116 = vld [vmem:[%s4 + $0xd8] sm:$0xff]
    %v1117 = vld [vmem:[%s4 + $0xe0] sm:$0xff]
    %v1118 = vld [vmem:[%s4 + $0xe8] sm:$0xff]
    %v1119 = vld [vmem:[%s4 + $0xf0] sm:$0xff]
    %v1120 = vld [vmem:[%s4 + $0xf8] sm:$0xff]
    %v1121 = vld [vmem:[%s4 + $0x100] sm:$0xff]
    %v1122 = vld [vmem:[%s4 + $0x108] sm:$0xff]
    %v1123 = vld [vmem:[%s4 + $0x110] sm:$0xff]
    %v1124 = vld [vmem:[%s4 + $0x118] sm:$0xff]
    %v1125 = vld [vmem:[%s4 + $0x120] sm:$0xff]
    %v1126 = vld [vmem:[%s4 + $0x128] sm:$0xff]
    %v1127 = vld [vmem:[%s4 + $0x130] sm:$0xff]
    %v1128 = vld [vmem:[%s4 + $0x138] sm:$0xff]
    %v1129 = vld [vmem:[%s4 + $0x140] sm:$0xff]
    %v1130 = vld [vmem:[%s4 + $0x148] sm:$0xff]
    %v1131 = vld [vmem:[%s4 + $0x150] sm:$0xff]
    %v1132 = vld [vmem:[%s4 + $0x158] sm:$0xff]
    %v1133 = vld [vmem:[%s4 + $0x160] sm:$0xff]
    %v1134 = vld [vmem:[%s4 + $0x168] sm:$0xff]
    %v1135 = vld [vmem:[%s4 + $0x170] sm:$0xff]
    %v1136 = vld [vmem:[%s4 + $0x178] sm:$0xff]
    %v1137 = vld [vmem:[%s4 + $0x180] sm:$0xff]
    %v1138 = vld [vmem:[%s4 + $0x188] sm:$0xff]
    %v1139 = vld [vmem:[%s4 + $0x190] sm:$0xff]
    %v1140 = vld [vmem:[%s4 + $0x198] sm:$0xff]
    %v1141 = vld [vmem:[%s4 + $0x1a0] sm:$0xff]
    %v1142 = vld [vmem:[%s4 + $0x1a8] sm:$0xff]
    %v1143 = vld [vmem:[%s4 + $0x1b0] sm:$0xff]
    %v1144 = vld [vmem:[%s4 + $0x1b8] sm:$0xff]
    %v1145 = vld [vmem:[%s4 + $0x1c0] sm:$0xff]
    %v1146 = vld [vmem:[%s4 + $0x1c8] sm:$0xff]
    %v1147 = vld [vmem:[%s4 + $0x1d0] sm:$0xff]
    %v1148 = vld [vmem:[%s4 + $0x1d8] sm:$0xff]
    %v1149 = vld [vmem:[%s4 + $0x1e0] sm:$0xff]
    %v1150 = vld [vmem:[%s4 + $0x1e8] sm:$0xff]
    %v1151 = vld [vmem:[%s4 + $0x1f0] sm:$0xff]
    %v1152 = vld [vmem:[%s4 + $0x1f8] sm:$0xff]
    %v1153 = vld [vmem:[%s5] sm:$0xff]
    %v1155 = vlaneseq
    %v1156 = vshrl.u32 %v1155, 7
    %v1157 = vsub.s32 0, %v1156
    %v1158 = vrot.slane %v1153, %v1157
    %v1159 = vlaneseq
    %v1160 = vshrl.u32 %v1159, 7
    %v1161 = vsub.s32 1, %v1160
    %v1162 = vrot.slane %v1153, %v1161
    %v1163 = vlaneseq
    %v1164 = vshrl.u32 %v1163, 7
    %v1165 = vsub.s32 2, %v1164
    %v1166 = vrot.slane %v1153, %v1165
    %v1167 = vlaneseq
    %v1168 = vshrl.u32 %v1167, 7
    %v1169 = vsub.s32 3, %v1168
    %v1170 = vrot.slane %v1153, %v1169
    %v1171 = vlaneseq
    %v1172 = vshrl.u32 %v1171, 7
    %v1173 = vsub.s32 4, %v1172
    %v1174 = vrot.slane %v1153, %v1173
    %v1175 = vlaneseq
    %v1176 = vshrl.u32 %v1175, 7
    %v1177 = vsub.s32 5, %v1176
    %v1178 = vrot.slane %v1153, %v1177
    %v1179 = vlaneseq
    %v1180 = vshrl.u32 %v1179, 7
    %v1181 = vsub.s32 6, %v1180
    %v1182 = vrot.slane %v1153, %v1181
    %v1183 = vlaneseq
    %v1184 = vshrl.u32 %v1183, 7
    %v1185 = vsub.s32 7, %v1184
    %v1186 = vrot.slane %v1153, %v1185
    %v1259 = vunpack.c.l.b16 %v1089
    %v1260 = vunpack.c.h.b16 %v1089
    %v1261 = vunpack.c.l.b16 %v1090
    %v1262 = vunpack.c.h.b16 %v1090
    %v1263 = vunpack.c.l.b16 %v1091
    %v1264 = vunpack.c.h.b16 %v1091
    %v1265 = vunpack.c.l.b16 %v1092
    %v1266 = vunpack.c.h.b16 %v1092
    %v1267 = vunpack.c.l.b16 %v1093
    %v1268 = vunpack.c.h.b16 %v1093
    %v1269 = vunpack.c.l.b16 %v1094
    %v1270 = vunpack.c.h.b16 %v1094
    %v1271 = vunpack.c.l.b16 %v1095
    %v1272 = vunpack.c.h.b16 %v1095
    %v1273 = vunpack.c.l.b16 %v1096
    %v1274 = vunpack.c.h.b16 %v1096
    %v1275 = vunpack.c.l.b16 %v1097
    %v1276 = vunpack.c.h.b16 %v1097
    %v1277 = vunpack.c.l.b16 %v1098
    %v1278 = vunpack.c.h.b16 %v1098
    %v1279 = vunpack.c.l.b16 %v1099
    %v1280 = vunpack.c.h.b16 %v1099
    %v1281 = vunpack.c.l.b16 %v1100
    %v1282 = vunpack.c.h.b16 %v1100
    %v1283 = vunpack.c.l.b16 %v1101
    %v1284 = vunpack.c.h.b16 %v1101
    %v1285 = vunpack.c.l.b16 %v1102
    %v1286 = vunpack.c.h.b16 %v1102
    %v1287 = vunpack.c.l.b16 %v1103
    %v1288 = vunpack.c.h.b16 %v1103
    %v1289 = vunpack.c.l.b16 %v1104
    %v1290 = vunpack.c.h.b16 %v1104
    %v1291 = vunpack.c.l.b16 %v1105
    %v1292 = vunpack.c.h.b16 %v1105
    %v1293 = vunpack.c.l.b16 %v1106
    %v1294 = vunpack.c.h.b16 %v1106
    %v1295 = vunpack.c.l.b16 %v1107
    %v1296 = vunpack.c.h.b16 %v1107
    %v1297 = vunpack.c.l.b16 %v1108
    %v1298 = vunpack.c.h.b16 %v1108
    %v1299 = vunpack.c.l.b16 %v1109
    %v1300 = vunpack.c.h.b16 %v1109
    %v1301 = vunpack.c.l.b16 %v1110
    %v1302 = vunpack.c.h.b16 %v1110
    %v1303 = vunpack.c.l.b16 %v1111
    %v1304 = vunpack.c.h.b16 %v1111
    %v1305 = vunpack.c.l.b16 %v1112
    %v1306 = vunpack.c.h.b16 %v1112
    %v1307 = vunpack.c.l.b16 %v1113
    %v1308 = vunpack.c.h.b16 %v1113
    %v1309 = vunpack.c.l.b16 %v1114
    %v1310 = vunpack.c.h.b16 %v1114
    %v1311 = vunpack.c.l.b16 %v1115
    %v1312 = vunpack.c.h.b16 %v1115
    %v1313 = vunpack.c.l.b16 %v1116
    %v1314 = vunpack.c.h.b16 %v1116
    %v1315 = vunpack.c.l.b16 %v1117
    %v1316 = vunpack.c.h.b16 %v1117
    %v1317 = vunpack.c.l.b16 %v1118
    %v1318 = vunpack.c.h.b16 %v1118
    %v1319 = vunpack.c.l.b16 %v1119
    %v1320 = vunpack.c.h.b16 %v1119
    %v1321 = vunpack.c.l.b16 %v1120
    %v1322 = vunpack.c.h.b16 %v1120
    %v1323 = vunpack.c.l.b16 %v1121
    %v1324 = vunpack.c.h.b16 %v1121
    %v1325 = vunpack.c.l.b16 %v1122
    %v1326 = vunpack.c.h.b16 %v1122
    %v1327 = vunpack.c.l.b16 %v1123
    %v1328 = vunpack.c.h.b16 %v1123
    %v1329 = vunpack.c.l.b16 %v1124
    %v1330 = vunpack.c.h.b16 %v1124
    %v1331 = vunpack.c.l.b16 %v1125
    %v1332 = vunpack.c.h.b16 %v1125
    %v1333 = vunpack.c.l.b16 %v1126
    %v1334 = vunpack.c.h.b16 %v1126
    %v1335 = vunpack.c.l.b16 %v1127
    %v1336 = vunpack.c.h.b16 %v1127
    %v1337 = vunpack.c.l.b16 %v1128
    %v1338 = vunpack.c.h.b16 %v1128
    %v1339 = vunpack.c.l.b16 %v1129
    %v1340 = vunpack.c.h.b16 %v1129
    %v1341 = vunpack.c.l.b16 %v1130
    %v1342 = vunpack.c.h.b16 %v1130
    %v1343 = vunpack.c.l.b16 %v1131
    %v1344 = vunpack.c.h.b16 %v1131
    %v1345 = vunpack.c.l.b16 %v1132
    %v1346 = vunpack.c.h.b16 %v1132
    %v1347 = vunpack.c.l.b16 %v1133
    %v1348 = vunpack.c.h.b16 %v1133
    %v1349 = vunpack.c.l.b16 %v1134
    %v1350 = vunpack.c.h.b16 %v1134
    %v1351 = vunpack.c.l.b16 %v1135
    %v1352 = vunpack.c.h.b16 %v1135
    %v1353 = vunpack.c.l.b16 %v1136
    %v1354 = vunpack.c.h.b16 %v1136
    %v1355 = vunpack.c.l.b16 %v1137
    %v1356 = vunpack.c.h.b16 %v1137
    %v1357 = vunpack.c.l.b16 %v1138
    %v1358 = vunpack.c.h.b16 %v1138
    %v1359 = vunpack.c.l.b16 %v1139
    %v1360 = vunpack.c.h.b16 %v1139
    %v1361 = vunpack.c.l.b16 %v1140
    %v1362 = vunpack.c.h.b16 %v1140
    %v1363 = vunpack.c.l.b16 %v1141
    %v1364 = vunpack.c.h.b16 %v1141
    %v1365 = vunpack.c.l.b16 %v1142
    %v1366 = vunpack.c.h.b16 %v1142
    %v1367 = vunpack.c.l.b16 %v1143
    %v1368 = vunpack.c.h.b16 %v1143
    %v1369 = vunpack.c.l.b16 %v1144
    %v1370 = vunpack.c.h.b16 %v1144
    %v1371 = vunpack.c.l.b16 %v1145
    %v1372 = vunpack.c.h.b16 %v1145
    %v1373 = vunpack.c.l.b16 %v1146
    %v1374 = vunpack.c.h.b16 %v1146
    %v1375 = vunpack.c.l.b16 %v1147
    %v1376 = vunpack.c.h.b16 %v1147
    %v1377 = vunpack.c.l.b16 %v1148
    %v1378 = vunpack.c.h.b16 %v1148
    %v1379 = vunpack.c.l.b16 %v1149
    %v1380 = vunpack.c.h.b16 %v1149
    %v1381 = vunpack.c.l.b16 %v1150
    %v1382 = vunpack.c.h.b16 %v1150
    %v1383 = vunpack.c.l.b16 %v1151
    %v1384 = vunpack.c.h.b16 %v1151
    %v1385 = vunpack.c.l.b16 %v1152
    %v1386 = vunpack.c.h.b16 %v1152
    %v1387 = vpack.c.b16 %v1267, %v1259
    %v1388 = vpack.c.b16 %v1268, %v1260
    %v1389 = vpack.c.b16 %v1269, %v1261
    %v1390 = vpack.c.b16 %v1270, %v1262
    %v1391 = vpack.c.b16 %v1271, %v1263
    %v1392 = vpack.c.b16 %v1272, %v1264
    %v1393 = vpack.c.b16 %v1273, %v1265
    %v1394 = vpack.c.b16 %v1274, %v1266
    %v1395 = vpack.c.b16 %v1283, %v1275
    %v1396 = vpack.c.b16 %v1284, %v1276
    %v1397 = vpack.c.b16 %v1285, %v1277
    %v1398 = vpack.c.b16 %v1286, %v1278
    %v1399 = vpack.c.b16 %v1287, %v1279
    %v1400 = vpack.c.b16 %v1288, %v1280
    %v1401 = vpack.c.b16 %v1289, %v1281
    %v1402 = vpack.c.b16 %v1290, %v1282
    %v1403 = vpack.c.b16 %v1299, %v1291
    %v1404 = vpack.c.b16 %v1300, %v1292
    %v1405 = vpack.c.b16 %v1301, %v1293
    %v1406 = vpack.c.b16 %v1302, %v1294
    %v1407 = vpack.c.b16 %v1303, %v1295
    %v1408 = vpack.c.b16 %v1304, %v1296
    %v1409 = vpack.c.b16 %v1305, %v1297
    %v1410 = vpack.c.b16 %v1306, %v1298
    %v1411 = vpack.c.b16 %v1315, %v1307
    %v1412 = vpack.c.b16 %v1316, %v1308
    %v1413 = vpack.c.b16 %v1317, %v1309
    %v1414 = vpack.c.b16 %v1318, %v1310
    %v1415 = vpack.c.b16 %v1319, %v1311
    %v1416 = vpack.c.b16 %v1320, %v1312
    %v1417 = vpack.c.b16 %v1321, %v1313
    %v1418 = vpack.c.b16 %v1322, %v1314
    %v1419 = vpack.c.b16 %v1331, %v1323
    %v1420 = vpack.c.b16 %v1332, %v1324
    %v1421 = vpack.c.b16 %v1333, %v1325
    %v1422 = vpack.c.b16 %v1334, %v1326
    %v1423 = vpack.c.b16 %v1335, %v1327
    %v1424 = vpack.c.b16 %v1336, %v1328
    %v1425 = vpack.c.b16 %v1337, %v1329
    %v1426 = vpack.c.b16 %v1338, %v1330
    %v1427 = vpack.c.b16 %v1347, %v1339
    %v1428 = vpack.c.b16 %v1348, %v1340
    %v1429 = vpack.c.b16 %v1349, %v1341
    %v1430 = vpack.c.b16 %v1350, %v1342
    %v1431 = vpack.c.b16 %v1351, %v1343
    %v1432 = vpack.c.b16 %v1352, %v1344
    %v1433 = vpack.c.b16 %v1353, %v1345
    %v1434 = vpack.c.b16 %v1354, %v1346
    %v1435 = vpack.c.b16 %v1363, %v1355
    %v1436 = vpack.c.b16 %v1364, %v1356
    %v1437 = vpack.c.b16 %v1365, %v1357
    %v1438 = vpack.c.b16 %v1366, %v1358
    %v1439 = vpack.c.b16 %v1367, %v1359
    %v1440 = vpack.c.b16 %v1368, %v1360
    %v1441 = vpack.c.b16 %v1369, %v1361
    %v1442 = vpack.c.b16 %v1370, %v1362
    %v1443 = vpack.c.b16 %v1379, %v1371
    %v1444 = vpack.c.b16 %v1380, %v1372
    %v1445 = vpack.c.b16 %v1381, %v1373
    %v1446 = vpack.c.b16 %v1382, %v1374
    %v1447 = vpack.c.b16 %v1383, %v1375
    %v1448 = vpack.c.b16 %v1384, %v1376
    %v1449 = vpack.c.b16 %v1385, %v1377
    %v1450 = vpack.c.b16 %v1386, %v1378
    %1515 = vmatprep.subr.bf16.mxu0 %v1388
    %1516 = vmatpush1.bf16.msra.mxu0 %v1387
    %1517 = vmatprep.subr.bf16.mxu0 %v1396
    %1518 = vmatpush1.bf16.msra.mxu0 %v1395
    %1519 = vmatprep.subr.bf16.mxu0 %v1404
    %1520 = vmatpush1.bf16.msra.mxu0 %v1403
    %1521 = vmatprep.subr.bf16.mxu0 %v1412
    %1522 = vmatpush1.bf16.msra.mxu0 %v1411
    %1523 = vmatprep.subr.bf16.mxu0 %v1420
    %1524 = vmatpush1.bf16.msra.mxu0 %v1419
    %1525 = vmatprep.subr.bf16.mxu0 %v1428
    %1526 = vmatpush1.bf16.msra.mxu0 %v1427
    %1527 = vmatprep.subr.bf16.mxu0 %v1436
    %1528 = vmatpush1.bf16.msra.mxu0 %v1435
    %1529 = vmatprep.subr.bf16.mxu0 %v1444
    %1530 = vmatpush1.bf16.msra.mxu0 %v1443
    %1531 = vmatprep.subr.bf16.mxu0 0
    %1532 = vmatpush1.bf16.msra.mxu0 0
    %1533 = vmatprep.subr.bf16.mxu0 0
    %1534 = vmatpush1.bf16.msra.mxu0 0
    %1535 = vmatprep.subr.bf16.mxu0 0
    %1536 = vmatpush1.bf16.msra.mxu0 0
    %1537 = vmatprep.subr.bf16.mxu0 0
    %1538 = vmatpush1.bf16.msra.mxu0 0
    %1539 = vmatprep.subr.bf16.mxu0 0
    %1540 = vmatpush1.bf16.msra.mxu0 0
    %1541 = vmatprep.subr.bf16.mxu0 0
    %1542 = vmatpush1.bf16.msra.mxu0 0
    %1543 = vmatprep.subr.bf16.mxu0 0
    %1544 = vmatpush1.bf16.msra.mxu0 0
    %1545 = vmatprep.subr.bf16.mxu0 0
    %1546 = vmatpush1.bf16.msra.mxu0 0
    %1547 = vmatprep.mubr.bf16.mxu0 0
    %1548 = vmatmul.mubr.bf16.gmra.mrb[0].mxu0 %v1088
    %v1549 = vpop.f32.mrb[0].mxu0
    %v1550 = vadd.f32 %v1158, %v1549
    %v1551 = vpop.f32.mrb[0].mxu0
    %v1552 = vadd.f32 %v1162, %v1551
    %v1553 = vpop.f32.mrb[0].mxu0
    %v1554 = vadd.f32 %v1158, %v1553
    %v1555 = vpop.f32.mrb[0].mxu0
    %v1556 = vadd.f32 %v1162, %v1555
    %1557 = vdwg.mxu0
    %1558 = vmatprep.subr.bf16.mxu0 %v1390
    %1559 = vmatpush1.bf16.msra.mxu0 %v1389
    %1560 = vmatprep.subr.bf16.mxu0 %v1398
    %1561 = vmatpush1.bf16.msra.mxu0 %v1397
    %1562 = vmatprep.subr.bf16.mxu0 %v1406
    %1563 = vmatpush1.bf16.msra.mxu0 %v1405
    %1564 = vmatprep.subr.bf16.mxu0 %v1414
    %1565 = vmatpush1.bf16.msra.mxu0 %v1413
    %1566 = vmatprep.subr.bf16.mxu0 %v1422
    %1567 = vmatpush1.bf16.msra.mxu0 %v1421
    %1568 = vmatprep.subr.bf16.mxu0 %v1430
    %1569 = vmatpush1.bf16.msra.mxu0 %v1429
    %1570 = vmatprep.subr.bf16.mxu0 %v1438
    %1571 = vmatpush1.bf16.msra.mxu0 %v1437
    %1572 = vmatprep.subr.bf16.mxu0 %v1446
    %1573 = vmatpush1.bf16.msra.mxu0 %v1445
    %1574 = vmatprep.subr.bf16.mxu0 0
    %1575 = vmatpush1.bf16.msra.mxu0 0
    %1576 = vmatprep.subr.bf16.mxu0 0
    %1577 = vmatpush1.bf16.msra.mxu0 0
    %1578 = vmatprep.subr.bf16.mxu0 0
    %1579 = vmatpush1.bf16.msra.mxu0 0
    %1580 = vmatprep.subr.bf16.mxu0 0
    %1581 = vmatpush1.bf16.msra.mxu0 0
    %1582 = vmatprep.subr.bf16.mxu0 0
    %1583 = vmatpush1.bf16.msra.mxu0 0
    %1584 = vmatprep.subr.bf16.mxu0 0
    %1585 = vmatpush1.bf16.msra.mxu0 0
    %1586 = vmatprep.subr.bf16.mxu0 0
    %1587 = vmatpush1.bf16.msra.mxu0 0
    %1588 = vmatprep.subr.bf16.mxu0 0
    %1589 = vmatpush1.bf16.msra.mxu0 0
    %1590 = vmatprep.mubr.bf16.mxu0 0
    %1591 = vmatmul.mubr.bf16.gmra.mrb[0].mxu0 %v1088
    %v1592 = vpop.f32.mrb[0].mxu0
    %v1593 = vadd.f32 %v1166, %v1592
    %v1594 = vpop.f32.mrb[0].mxu0
    %v1595 = vadd.f32 %v1170, %v1594
    %v1596 = vpop.f32.mrb[0].mxu0
    %v1597 = vadd.f32 %v1166, %v1596
    %v1598 = vpop.f32.mrb[0].mxu0
    %v1599 = vadd.f32 %v1170, %v1598
    %1600 = vdwg.mxu0
    %1601 = vmatprep.subr.bf16.mxu0 %v1392
    %1602 = vmatpush1.bf16.msra.mxu0 %v1391
    %1603 = vmatprep.subr.bf16.mxu0 %v1400
    %1604 = vmatpush1.bf16.msra.mxu0 %v1399
    %1605 = vmatprep.subr.bf16.mxu0 %v1408
    %1606 = vmatpush1.bf16.msra.mxu0 %v1407
    %1607 = vmatprep.subr.bf16.mxu0 %v1416
    %1608 = vmatpush1.bf16.msra.mxu0 %v1415
    %1609 = vmatprep.subr.bf16.mxu0 %v1424
    %1610 = vmatpush1.bf16.msra.mxu0 %v1423
    %1611 = vmatprep.subr.bf16.mxu0 %v1432
    %1612 = vmatpush1.bf16.msra.mxu0 %v1431
    %1613 = vmatprep.subr.bf16.mxu0 %v1440
    %1614 = vmatpush1.bf16.msra.mxu0 %v1439
    %1615 = vmatprep.subr.bf16.mxu0 %v1448
    %1616 = vmatpush1.bf16.msra.mxu0 %v1447
    %1617 = vmatprep.subr.bf16.mxu0 0
    %1618 = vmatpush1.bf16.msra.mxu0 0
    %1619 = vmatprep.subr.bf16.mxu0 0
    %1620 = vmatpush1.bf16.msra.mxu0 0
    %1621 = vmatprep.subr.bf16.mxu0 0
    %1622 = vmatpush1.bf16.msra.mxu0 0
    %1623 = vmatprep.subr.bf16.mxu0 0
    %1624 = vmatpush1.bf16.msra.mxu0 0
    %1625 = vmatprep.subr.bf16.mxu0 0
    %1626 = vmatpush1.bf16.msra.mxu0 0
    %1627 = vmatprep.subr.bf16.mxu0 0
    %1628 = vmatpush1.bf16.msra.mxu0 0
    %1629 = vmatprep.subr.bf16.mxu0 0
    %1630 = vmatpush1.bf16.msra.mxu0 0
    %1631 = vmatprep.subr.bf16.mxu0 0
    %1632 = vmatpush1.bf16.msra.mxu0 0
    %1633 = vmatprep.mubr.bf16.mxu0 0
    %1634 = vmatmul.mubr.bf16.gmra.mrb[0].mxu0 %v1088
    %v1635 = vpop.f32.mrb[0].mxu0
    %v1636 = vadd.f32 %v1174, %v1635
    %v1637 = vpop.f32.mrb[0].mxu0
    %v1638 = vadd.f32 %v1178, %v1637
    %v1639 = vpop.f32.mrb[0].mxu0
    %v1640 = vadd.f32 %v1174, %v1639
    %v1641 = vpop.f32.mrb[0].mxu0
    %v1642 = vadd.f32 %v1178, %v1641
    %1643 = vdwg.mxu0
    %1644 = vmatprep.subr.bf16.mxu0 %v1394
    %1645 = vmatpush1.bf16.msra.mxu0 %v1393
    %1646 = vmatprep.subr.bf16.mxu0 %v1402
    %1647 = vmatpush1.bf16.msra.mxu0 %v1401
    %1648 = vmatprep.subr.bf16.mxu0 %v1410
    %1649 = vmatpush1.bf16.msra.mxu0 %v1409
    %1650 = vmatprep.subr.bf16.mxu0 %v1418
    %1651 = vmatpush1.bf16.msra.mxu0 %v1417
    %1652 = vmatprep.subr.bf16.mxu0 %v1426
    %1653 = vmatpush1.bf16.msra.mxu0 %v1425
    %1654 = vmatprep.subr.bf16.mxu0 %v1434
    %1655 = vmatpush1.bf16.msra.mxu0 %v1433
    %1656 = vmatprep.subr.bf16.mxu0 %v1442
    %1657 = vmatpush1.bf16.msra.mxu0 %v1441
    %1658 = vmatprep.subr.bf16.mxu0 %v1450
    %1659 = vmatpush1.bf16.msra.mxu0 %v1449
    %1660 = vmatprep.subr.bf16.mxu0 0
    %1661 = vmatpush1.bf16.msra.mxu0 0
    %1662 = vmatprep.subr.bf16.mxu0 0
    %1663 = vmatpush1.bf16.msra.mxu0 0
    %1664 = vmatprep.subr.bf16.mxu0 0
    %1665 = vmatpush1.bf16.msra.mxu0 0
    %1666 = vmatprep.subr.bf16.mxu0 0
    %1667 = vmatpush1.bf16.msra.mxu0 0
    %1668 = vmatprep.subr.bf16.mxu0 0
    %1669 = vmatpush1.bf16.msra.mxu0 0
    %1670 = vmatprep.subr.bf16.mxu0 0
    %1671 = vmatpush1.bf16.msra.mxu0 0
    %1672 = vmatprep.subr.bf16.mxu0 0
    %1673 = vmatpush1.bf16.msra.mxu0 0
    %1674 = vmatprep.subr.bf16.mxu0 0
    %1675 = vmatpush1.bf16.msra.mxu0 0
    %1676 = vmatprep.mubr.bf16.mxu0 0
    %1677 = vmatmul.mubr.bf16.gmra.mrb[0].mxu0 %v1088
    %v1678 = vpop.f32.mrb[0].mxu0
    %v1679 = vadd.f32 %v1182, %v1678
    %v1680 = vpop.f32.mrb[0].mxu0
    %v1681 = vadd.f32 %v1186, %v1680
    %v1682 = vpop.f32.mrb[0].mxu0
    %v1683 = vadd.f32 %v1182, %v1682
    %v1684 = vpop.f32.mrb[0].mxu0
    %v1685 = vadd.f32 %v1186, %v1684
    %1686 = vdwg.mxu0
    %v1687 = vtanh.pop %v1550
    %v1688 = vtanh.pop %v1552
    %v1689 = vtanh.pop %v1593
    %v1690 = vtanh.pop %v1595
    %v1691 = vtanh.pop %v1636
    %v1692 = vtanh.pop %v1638
    %v1693 = vtanh.pop %v1679
    %v1694 = vtanh.pop %v1681
    %v1695 = vtanh.pop %v1554
    %v1696 = vtanh.pop %v1556
    %v1697 = vtanh.pop %v1597
    %v1698 = vtanh.pop %v1599
    %v1699 = vtanh.pop %v1640
    %v1700 = vtanh.pop %v1642
    %v1701 = vtanh.pop %v1683
    %v1702 = vtanh.pop %v1685
    %v1703 = vld [vmem:[#allocation5] sm:$0xf]
    %v1704 = vld [vmem:[#allocation5 + $0x4] sm:$0xf]
    %v1705 = vld [vmem:[#allocation5 + $0x8] sm:$0xf]
    %v1706 = vld [vmem:[#allocation5 + $0xc] sm:$0xf]
    %v1707 = vld [vmem:[#allocation5 + $0x10] sm:$0xf]
    %v1708 = vld [vmem:[#allocation5 + $0x14] sm:$0xf]
    %v1709 = vld [vmem:[#allocation5 + $0x18] sm:$0xf]
    %v1710 = vld [vmem:[#allocation5 + $0x1c] sm:$0xf]
    %v1711 = vld [vmem:[#allocation5 + $0x20] sm:$0xf]
    %v1712 = vld [vmem:[#allocation5 + $0x24] sm:$0xf]
    %v1713 = vld [vmem:[#allocation5 + $0x28] sm:$0xf]
    %v1714 = vld [vmem:[#allocation5 + $0x2c] sm:$0xf]
    %v1715 = vld [vmem:[#allocation5 + $0x30] sm:$0xf]
    %v1716 = vld [vmem:[#allocation5 + $0x34] sm:$0xf]
    %v1717 = vld [vmem:[#allocation5 + $0x38] sm:$0xf]
    %v1718 = vld [vmem:[#allocation5 + $0x3c] sm:$0xf]
    %v1719 = vld [vmem:[#allocation5 + $0x40] sm:$0xf]
    %v1720 = vld [vmem:[#allocation5 + $0x44] sm:$0xf]
    %v1721 = vld [vmem:[#allocation5 + $0x48] sm:$0xf]
    %v1722 = vld [vmem:[#allocation5 + $0x4c] sm:$0xf]
    %v1723 = vld [vmem:[#allocation5 + $0x50] sm:$0xf]
    %v1724 = vld [vmem:[#allocation5 + $0x54] sm:$0xf]
    %v1725 = vld [vmem:[#allocation5 + $0x58] sm:$0xf]
    %v1726 = vld [vmem:[#allocation5 + $0x5c] sm:$0xf]
    %v1727 = vld [vmem:[#allocation5 + $0x60] sm:$0xf]
    %v1728 = vld [vmem:[#allocation5 + $0x64] sm:$0xf]
    %v1729 = vld [vmem:[#allocation5 + $0x68] sm:$0xf]
    %v1730 = vld [vmem:[#allocation5 + $0x6c] sm:$0xf]
    %v1731 = vld [vmem:[#allocation5 + $0x70] sm:$0xf]
    %v1732 = vld [vmem:[#allocation5 + $0x74] sm:$0xf]
    %v1733 = vld [vmem:[#allocation5 + $0x78] sm:$0xf]
    %v1734 = vld [vmem:[#allocation5 + $0x7c] sm:$0xf]
    %v1735 = vld [vmem:[#allocation5 + $0x80] sm:$0xf]
    %v1736 = vld [vmem:[#allocation5 + $0x84] sm:$0xf]
    %v1737 = vld [vmem:[#allocation5 + $0x88] sm:$0xf]
    %v1738 = vld [vmem:[#allocation5 + $0x8c] sm:$0xf]
    %v1739 = vld [vmem:[#allocation5 + $0x90] sm:$0xf]
    %v1740 = vld [vmem:[#allocation5 + $0x94] sm:$0xf]
    %v1741 = vld [vmem:[#allocation5 + $0x98] sm:$0xf]
    %v1742 = vld [vmem:[#allocation5 + $0x9c] sm:$0xf]
    %v1743 = vld [vmem:[#allocation5 + $0xa0] sm:$0xf]
    %v1744 = vld [vmem:[#allocation5 + $0xa4] sm:$0xf]
    %v1745 = vld [vmem:[#allocation5 + $0xa8] sm:$0xf]
    %v1746 = vld [vmem:[#allocation5 + $0xac] sm:$0xf]
    %v1747 = vld [vmem:[#allocation5 + $0xb0] sm:$0xf]
    %v1748 = vld [vmem:[#allocation5 + $0xb4] sm:$0xf]
    %v1749 = vld [vmem:[#allocation5 + $0xb8] sm:$0xf]
    %v1750 = vld [vmem:[#allocation5 + $0xbc] sm:$0xf]
    %v1751 = vld [vmem:[#allocation5 + $0xc0] sm:$0xf]
    %v1752 = vld [vmem:[#allocation5 + $0xc4] sm:$0xf]
    %v1753 = vld [vmem:[#allocation5 + $0xc8] sm:$0xf]
    %v1754 = vld [vmem:[#allocation5 + $0xcc] sm:$0xf]
    %v1755 = vld [vmem:[#allocation5 + $0xd0] sm:$0xf]
    %v1756 = vld [vmem:[#allocation5 + $0xd4] sm:$0xf]
    %v1757 = vld [vmem:[#allocation5 + $0xd8] sm:$0xf]
    %v1758 = vld [vmem:[#allocation5 + $0xdc] sm:$0xf]
    %v1759 = vld [vmem:[#allocation5 + $0xe0] sm:$0xf]
    %v1760 = vld [vmem:[#allocation5 + $0xe4] sm:$0xf]
    %v1761 = vld [vmem:[#allocation5 + $0xe8] sm:$0xf]
    %v1762 = vld [vmem:[#allocation5 + $0xec] sm:$0xf]
    %v1763 = vld [vmem:[#allocation5 + $0xf0] sm:$0xf]
    %v1764 = vld [vmem:[#allocation5 + $0xf4] sm:$0xf]
    %v1765 = vld [vmem:[#allocation5 + $0xf8] sm:$0xf]
    %v1766 = vld [vmem:[#allocation5 + $0xfc] sm:$0xf]
    %v1767 = vld [vmem:[#allocation5 + $0x100] sm:$0xf]
    %v1768 = vld [vmem:[#allocation5 + $0x104] sm:$0xf]
    %v1769 = vld [vmem:[#allocation5 + $0x108] sm:$0xf]
    %v1770 = vld [vmem:[#allocation5 + $0x10c] sm:$0xf]
    %v1771 = vld [vmem:[#allocation5 + $0x110] sm:$0xf]
    %v1772 = vld [vmem:[#allocation5 + $0x114] sm:$0xf]
    %v1773 = vld [vmem:[#allocation5 + $0x118] sm:$0xf]
    %v1774 = vld [vmem:[#allocation5 + $0x11c] sm:$0xf]
    %v1775 = vld [vmem:[#allocation5 + $0x120] sm:$0xf]
    %v1776 = vld [vmem:[#allocation5 + $0x124] sm:$0xf]
    %v1777 = vld [vmem:[#allocation5 + $0x128] sm:$0xf]
    %v1778 = vld [vmem:[#allocation5 + $0x12c] sm:$0xf]
    %v1779 = vld [vmem:[#allocation5 + $0x130] sm:$0xf]
    %v1780 = vld [vmem:[#allocation5 + $0x134] sm:$0xf]
    %v1781 = vld [vmem:[#allocation5 + $0x138] sm:$0xf]
    %v1782 = vld [vmem:[#allocation5 + $0x13c] sm:$0xf]
    %v1783 = vld [vmem:[#allocation5 + $0x140] sm:$0xf]
    %v1784 = vld [vmem:[#allocation5 + $0x144] sm:$0xf]
    %v1785 = vld [vmem:[#allocation5 + $0x148] sm:$0xf]
    %v1786 = vld [vmem:[#allocation5 + $0x14c] sm:$0xf]
    %v1787 = vld [vmem:[#allocation5 + $0x150] sm:$0xf]
    %v1788 = vld [vmem:[#allocation5 + $0x154] sm:$0xf]
    %v1789 = vld [vmem:[#allocation5 + $0x158] sm:$0xf]
    %v1790 = vld [vmem:[#allocation5 + $0x15c] sm:$0xf]
    %v1791 = vld [vmem:[#allocation5 + $0x160] sm:$0xf]
    %v1792 = vld [vmem:[#allocation5 + $0x164] sm:$0xf]
    %v1793 = vld [vmem:[#allocation5 + $0x168] sm:$0xf]
    %v1794 = vld [vmem:[#allocation5 + $0x16c] sm:$0xf]
    %v1795 = vld [vmem:[#allocation5 + $0x170] sm:$0xf]
    %v1796 = vld [vmem:[#allocation5 + $0x174] sm:$0xf]
    %v1797 = vld [vmem:[#allocation5 + $0x178] sm:$0xf]
    %v1798 = vld [vmem:[#allocation5 + $0x17c] sm:$0xf]
    %v1799 = vld [vmem:[#allocation5 + $0x180] sm:$0xf]
    %v1800 = vld [vmem:[#allocation5 + $0x184] sm:$0xf]
    %v1801 = vld [vmem:[#allocation5 + $0x188] sm:$0xf]
    %v1802 = vld [vmem:[#allocation5 + $0x18c] sm:$0xf]
    %v1803 = vld [vmem:[#allocation5 + $0x190] sm:$0xf]
    %v1804 = vld [vmem:[#allocation5 + $0x194] sm:$0xf]
    %v1805 = vld [vmem:[#allocation5 + $0x198] sm:$0xf]
    %v1806 = vld [vmem:[#allocation5 + $0x19c] sm:$0xf]
    %v1807 = vld [vmem:[#allocation5 + $0x1a0] sm:$0xf]
    %v1808 = vld [vmem:[#allocation5 + $0x1a4] sm:$0xf]
    %v1809 = vld [vmem:[#allocation5 + $0x1a8] sm:$0xf]
    %v1810 = vld [vmem:[#allocation5 + $0x1ac] sm:$0xf]
    %v1811 = vld [vmem:[#allocation5 + $0x1b0] sm:$0xf]
    %v1812 = vld [vmem:[#allocation5 + $0x1b4] sm:$0xf]
    %v1813 = vld [vmem:[#allocation5 + $0x1b8] sm:$0xf]
    %v1814 = vld [vmem:[#allocation5 + $0x1bc] sm:$0xf]
    %v1815 = vld [vmem:[#allocation5 + $0x1c0] sm:$0xf]
    %v1816 = vld [vmem:[#allocation5 + $0x1c4] sm:$0xf]
    %v1817 = vld [vmem:[#allocation5 + $0x1c8] sm:$0xf]
    %v1818 = vld [vmem:[#allocation5 + $0x1cc] sm:$0xf]
    %v1819 = vld [vmem:[#allocation5 + $0x1d0] sm:$0xf]
    %v1820 = vld [vmem:[#allocation5 + $0x1d4] sm:$0xf]
    %v1821 = vld [vmem:[#allocation5 + $0x1d8] sm:$0xf]
    %v1822 = vld [vmem:[#allocation5 + $0x1dc] sm:$0xf]
    %v1823 = vld [vmem:[#allocation5 + $0x1e0] sm:$0xf]
    %v1824 = vld [vmem:[#allocation5 + $0x1e4] sm:$0xf]
    %v1825 = vld [vmem:[#allocation5 + $0x1e8] sm:$0xf]
    %v1826 = vld [vmem:[#allocation5 + $0x1ec] sm:$0xf]
    %v1827 = vld [vmem:[#allocation5 + $0x1f0] sm:$0xf]
    %v1828 = vld [vmem:[#allocation5 + $0x1f4] sm:$0xf]
    %v1829 = vld [vmem:[#allocation5 + $0x1f8] sm:$0xf]
    %v1830 = vld [vmem:[#allocation5 + $0x1fc] sm:$0xf]
    %v1839 = vunpack.c.l.b16 %v68
    %v1840 = vunpack.c.h.b16 %v68
    %v1841 = vunpack.c.l.b16 %v69
    %v1842 = vunpack.c.h.b16 %v69
    %v1843 = vunpack.c.l.b16 %v70
    %v1844 = vunpack.c.h.b16 %v70
    %v1845 = vunpack.c.l.b16 %v71
    %v1846 = vunpack.c.h.b16 %v71
    %v1847 = vunpack.c.l.b16 %v72
    %v1848 = vunpack.c.h.b16 %v72
    %v1849 = vunpack.c.l.b16 %v73
    %v1850 = vunpack.c.h.b16 %v73
    %v1851 = vunpack.c.l.b16 %v74
    %v1852 = vunpack.c.h.b16 %v74
    %v1853 = vunpack.c.l.b16 %v75
    %v1854 = vunpack.c.h.b16 %v75
    %v1855 = vpack.c.b16 %v1847, %v1839
    %v1856 = vpack.c.b16 %v1848, %v1840
    %v1857 = vpack.c.b16 %v1849, %v1841
    %v1858 = vpack.c.b16 %v1850, %v1842
    %v1859 = vpack.c.b16 %v1851, %v1843
    %v1860 = vpack.c.b16 %v1852, %v1844
    %v1861 = vpack.c.b16 %v1853, %v1845
    %v1862 = vpack.c.b16 %v1854, %v1846
    %v1999 = vunpack.c.l.b16 %v1703
    %v2000 = vunpack.c.l.b16 %v1704
    %v2001 = vunpack.c.l.b16 %v1705
    %v2002 = vunpack.c.l.b16 %v1706
    %v2003 = vunpack.c.l.b16 %v1707
    %v2004 = vunpack.c.l.b16 %v1708
    %v2005 = vunpack.c.l.b16 %v1709
    %v2006 = vunpack.c.l.b16 %v1710
    %v2007 = vunpack.c.l.b16 %v1711
    %v2008 = vunpack.c.l.b16 %v1712
    %v2009 = vunpack.c.l.b16 %v1713
    %v2010 = vunpack.c.l.b16 %v1714
    %v2011 = vunpack.c.l.b16 %v1715
    %v2012 = vunpack.c.l.b16 %v1716
    %v2013 = vunpack.c.l.b16 %v1717
    %v2014 = vunpack.c.l.b16 %v1718
    %v2015 = vunpack.c.l.b16 %v1719
    %v2016 = vunpack.c.l.b16 %v1720
    %v2017 = vunpack.c.l.b16 %v1721
    %v2018 = vunpack.c.l.b16 %v1722
    %v2019 = vunpack.c.l.b16 %v1723
    %v2020 = vunpack.c.l.b16 %v1724
    %v2021 = vunpack.c.l.b16 %v1725
    %v2022 = vunpack.c.l.b16 %v1726
    %v2023 = vunpack.c.l.b16 %v1727
    %v2024 = vunpack.c.l.b16 %v1728
    %v2025 = vunpack.c.l.b16 %v1729
    %v2026 = vunpack.c.l.b16 %v1730
    %v2027 = vunpack.c.l.b16 %v1731
    %v2028 = vunpack.c.l.b16 %v1732
    %v2029 = vunpack.c.l.b16 %v1733
    %v2030 = vunpack.c.l.b16 %v1734
    %v2031 = vunpack.c.l.b16 %v1735
    %v2032 = vunpack.c.l.b16 %v1736
    %v2033 = vunpack.c.l.b16 %v1737
    %v2034 = vunpack.c.l.b16 %v1738
    %v2035 = vunpack.c.l.b16 %v1739
    %v2036 = vunpack.c.l.b16 %v1740
    %v2037 = vunpack.c.l.b16 %v1741
    %v2038 = vunpack.c.l.b16 %v1742
    %v2039 = vunpack.c.l.b16 %v1743
    %v2040 = vunpack.c.l.b16 %v1744
    %v2041 = vunpack.c.l.b16 %v1745
    %v2042 = vunpack.c.l.b16 %v1746
    %v2043 = vunpack.c.l.b16 %v1747
    %v2044 = vunpack.c.l.b16 %v1748
    %v2045 = vunpack.c.l.b16 %v1749
    %v2046 = vunpack.c.l.b16 %v1750
    %v2047 = vunpack.c.l.b16 %v1751
    %v2048 = vunpack.c.l.b16 %v1752
    %v2049 = vunpack.c.l.b16 %v1753
    %v2050 = vunpack.c.l.b16 %v1754
    %v2051 = vunpack.c.l.b16 %v1755
    %v2052 = vunpack.c.l.b16 %v1756
    %v2053 = vunpack.c.l.b16 %v1757
    %v2054 = vunpack.c.l.b16 %v1758
    %v2055 = vunpack.c.l.b16 %v1759
    %v2056 = vunpack.c.l.b16 %v1760
    %v2057 = vunpack.c.l.b16 %v1761
    %v2058 = vunpack.c.l.b16 %v1762
    %v2059 = vunpack.c.l.b16 %v1763
    %v2060 = vunpack.c.l.b16 %v1764
    %v2061 = vunpack.c.l.b16 %v1765
    %v2062 = vunpack.c.l.b16 %v1766
    %v2063 = vunpack.c.l.b16 %v1767
    %v2064 = vunpack.c.l.b16 %v1768
    %v2065 = vunpack.c.l.b16 %v1769
    %v2066 = vunpack.c.l.b16 %v1770
    %v2067 = vunpack.c.l.b16 %v1771
    %v2068 = vunpack.c.l.b16 %v1772
    %v2069 = vunpack.c.l.b16 %v1773
    %v2070 = vunpack.c.l.b16 %v1774
    %v2071 = vunpack.c.l.b16 %v1775
    %v2072 = vunpack.c.l.b16 %v1776
    %v2073 = vunpack.c.l.b16 %v1777
    %v2074 = vunpack.c.l.b16 %v1778
    %v2075 = vunpack.c.l.b16 %v1779
    %v2076 = vunpack.c.l.b16 %v1780
    %v2077 = vunpack.c.l.b16 %v1781
    %v2078 = vunpack.c.l.b16 %v1782
    %v2079 = vunpack.c.l.b16 %v1783
    %v2080 = vunpack.c.l.b16 %v1784
    %v2081 = vunpack.c.l.b16 %v1785
    %v2082 = vunpack.c.l.b16 %v1786
    %v2083 = vunpack.c.l.b16 %v1787
    %v2084 = vunpack.c.l.b16 %v1788
    %v2085 = vunpack.c.l.b16 %v1789
    %v2086 = vunpack.c.l.b16 %v1790
    %v2087 = vunpack.c.l.b16 %v1791
    %v2088 = vunpack.c.l.b16 %v1792
    %v2089 = vunpack.c.l.b16 %v1793
    %v2090 = vunpack.c.l.b16 %v1794
    %v2091 = vunpack.c.l.b16 %v1795
    %v2092 = vunpack.c.l.b16 %v1796
    %v2093 = vunpack.c.l.b16 %v1797
    %v2094 = vunpack.c.l.b16 %v1798
    %v2095 = vunpack.c.l.b16 %v1799
    %v2096 = vunpack.c.l.b16 %v1800
    %v2097 = vunpack.c.l.b16 %v1801
    %v2098 = vunpack.c.l.b16 %v1802
    %v2099 = vunpack.c.l.b16 %v1803
    %v2100 = vunpack.c.l.b16 %v1804
    %v2101 = vunpack.c.l.b16 %v1805
    %v2102 = vunpack.c.l.b16 %v1806
    %v2103 = vunpack.c.l.b16 %v1807
    %v2104 = vunpack.c.l.b16 %v1808
    %v2105 = vunpack.c.l.b16 %v1809
    %v2106 = vunpack.c.l.b16 %v1810
    %v2107 = vunpack.c.l.b16 %v1811
    %v2108 = vunpack.c.l.b16 %v1812
    %v2109 = vunpack.c.l.b16 %v1813
    %v2110 = vunpack.c.l.b16 %v1814
    %v2111 = vunpack.c.l.b16 %v1815
    %v2112 = vunpack.c.l.b16 %v1816
    %v2113 = vunpack.c.l.b16 %v1817
    %v2114 = vunpack.c.l.b16 %v1818
    %v2115 = vunpack.c.l.b16 %v1819
    %v2116 = vunpack.c.l.b16 %v1820
    %v2117 = vunpack.c.l.b16 %v1821
    %v2118 = vunpack.c.l.b16 %v1822
    %v2119 = vunpack.c.l.b16 %v1823
    %v2120 = vunpack.c.l.b16 %v1824
    %v2121 = vunpack.c.l.b16 %v1825
    %v2122 = vunpack.c.l.b16 %v1826
    %v2123 = vunpack.c.l.b16 %v1827
    %v2124 = vunpack.c.l.b16 %v1828
    %v2125 = vunpack.c.l.b16 %v1829
    %v2126 = vunpack.c.l.b16 %v1830
    %v2127 = vpack.c.b16 %v2000, %v1999
    %v2128 = vpack.c.b16 %v2002, %v2001
    %v2129 = vpack.c.b16 %v2004, %v2003
    %v2130 = vpack.c.b16 %v2006, %v2005
    %v2131 = vpack.c.b16 %v2008, %v2007
    %v2132 = vpack.c.b16 %v2010, %v2009
    %v2133 = vpack.c.b16 %v2012, %v2011
    %v2134 = vpack.c.b16 %v2014, %v2013
    %v2135 = vpack.c.b16 %v2016, %v2015
    %v2136 = vpack.c.b16 %v2018, %v2017
    %v2137 = vpack.c.b16 %v2020, %v2019
    %v2138 = vpack.c.b16 %v2022, %v2021
    %v2139 = vpack.c.b16 %v2024, %v2023
    %v2140 = vpack.c.b16 %v2026, %v2025
    %v2141 = vpack.c.b16 %v2028, %v2027
    %v2142 = vpack.c.b16 %v2030, %v2029
    %v2143 = vpack.c.b16 %v2032, %v2031
    %v2144 = vpack.c.b16 %v2034, %v2033
    %v2145 = vpack.c.b16 %v2036, %v2035
    %v2146 = vpack.c.b16 %v2038, %v2037
    %v2147 = vpack.c.b16 %v2040, %v2039
    %v2148 = vpack.c.b16 %v2042, %v2041
    %v2149 = vpack.c.b16 %v2044, %v2043
    %v2150 = vpack.c.b16 %v2046, %v2045
    %v2151 = vpack.c.b16 %v2048, %v2047
    %v2152 = vpack.c.b16 %v2050, %v2049
    %v2153 = vpack.c.b16 %v2052, %v2051
    %v2154 = vpack.c.b16 %v2054, %v2053
    %v2155 = vpack.c.b16 %v2056, %v2055
    %v2156 = vpack.c.b16 %v2058, %v2057
    %v2157 = vpack.c.b16 %v2060, %v2059
    %v2158 = vpack.c.b16 %v2062, %v2061
    %v2159 = vpack.c.b16 %v2064, %v2063
    %v2160 = vpack.c.b16 %v2066, %v2065
    %v2161 = vpack.c.b16 %v2068, %v2067
    %v2162 = vpack.c.b16 %v2070, %v2069
    %v2163 = vpack.c.b16 %v2072, %v2071
    %v2164 = vpack.c.b16 %v2074, %v2073
    %v2165 = vpack.c.b16 %v2076, %v2075
    %v2166 = vpack.c.b16 %v2078, %v2077
    %v2167 = vpack.c.b16 %v2080, %v2079
    %v2168 = vpack.c.b16 %v2082, %v2081
    %v2169 = vpack.c.b16 %v2084, %v2083
    %v2170 = vpack.c.b16 %v2086, %v2085
    %v2171 = vpack.c.b16 %v2088, %v2087
    %v2172 = vpack.c.b16 %v2090, %v2089
    %v2173 = vpack.c.b16 %v2092, %v2091
    %v2174 = vpack.c.b16 %v2094, %v2093
    %v2175 = vpack.c.b16 %v2096, %v2095
    %v2176 = vpack.c.b16 %v2098, %v2097
    %v2177 = vpack.c.b16 %v2100, %v2099
    %v2178 = vpack.c.b16 %v2102, %v2101
    %v2179 = vpack.c.b16 %v2104, %v2103
    %v2180 = vpack.c.b16 %v2106, %v2105
    %v2181 = vpack.c.b16 %v2108, %v2107
    %v2182 = vpack.c.b16 %v2110, %v2109
    %v2183 = vpack.c.b16 %v2112, %v2111
    %v2184 = vpack.c.b16 %v2114, %v2113
    %v2185 = vpack.c.b16 %v2116, %v2115
    %v2186 = vpack.c.b16 %v2118, %v2117
    %v2187 = vpack.c.b16 %v2120, %v2119
    %v2188 = vpack.c.b16 %v2122, %v2121
    %v2189 = vpack.c.b16 %v2124, %v2123
    %v2190 = vpack.c.b16 %v2126, %v2125
    %2255 = vmatprep.subr.bf16.mxu0 0
    %2256 = vmatpush1.bf16.msra.mxu0 %v2127
    %2257 = vmatprep.subr.bf16.mxu0 0
    %2258 = vmatpush1.bf16.msra.mxu0 %v2128
    %2259 = vmatprep.subr.bf16.mxu0 0
    %2260 = vmatpush1.bf16.msra.mxu0 %v2129
    %2261 = vmatprep.subr.bf16.mxu0 0
    %2262 = vmatpush1.bf16.msra.mxu0 %v2130
    %2263 = vmatprep.subr.bf16.mxu0 0
    %2264 = vmatpush1.bf16.msra.mxu0 %v2131
    %2265 = vmatprep.subr.bf16.mxu0 0
    %2266 = vmatpush1.bf16.msra.mxu0 %v2132
    %2267 = vmatprep.subr.bf16.mxu0 0
    %2268 = vmatpush1.bf16.msra.mxu0 %v2133
    %2269 = vmatprep.subr.bf16.mxu0 0
    %2270 = vmatpush1.bf16.msra.mxu0 %v2134
    %2271 = vmatprep.subr.bf16.mxu0 0
    %2272 = vmatpush1.bf16.msra.mxu0 %v2135
    %2273 = vmatprep.subr.bf16.mxu0 0
    %2274 = vmatpush1.bf16.msra.mxu0 %v2136
    %2275 = vmatprep.subr.bf16.mxu0 0
    %2276 = vmatpush1.bf16.msra.mxu0 %v2137
    %2277 = vmatprep.subr.bf16.mxu0 0
    %2278 = vmatpush1.bf16.msra.mxu0 %v2138
    %2279 = vmatprep.subr.bf16.mxu0 0
    %2280 = vmatpush1.bf16.msra.mxu0 %v2139
    %2281 = vmatprep.subr.bf16.mxu0 0
    %2282 = vmatpush1.bf16.msra.mxu0 %v2140
    %2283 = vmatprep.subr.bf16.mxu0 0
    %2284 = vmatpush1.bf16.msra.mxu0 %v2141
    %2285 = vmatprep.subr.bf16.mxu0 0
    %2286 = vmatpush1.bf16.msra.mxu0 %v2142
    %2287 = vmatprep.mubr.bf16.mxu0 %v1856
    %2288 = vmatmul.mubr.bf16.gmra.mrb[0].mxu0 %v1855
    %v2289 = vpop.f32.mrb[0].mxu0
    %v2290 = vadd.f32 %v1080, %v2289
    %v2291 = vpop.f32.mrb[0].mxu0
    %v2292 = vpop.f32.mrb[0].mxu0
    %v2293 = vadd.f32 %v1081, %v2292
    %v2294 = vpop.f32.mrb[0].mxu0
    %2295 = vdwg.mxu0
    %2296 = vmatprep.subr.bf16.mxu0 0
    %2297 = vmatpush1.bf16.msra.mxu0 %v2143
    %2298 = vmatprep.subr.bf16.mxu0 0
    %2299 = vmatpush1.bf16.msra.mxu0 %v2144
    %2300 = vmatprep.subr.bf16.mxu0 0
    %2301 = vmatpush1.bf16.msra.mxu0 %v2145
    %2302 = vmatprep.subr.bf16.mxu0 0
    %2303 = vmatpush1.bf16.msra.mxu0 %v2146
    %2304 = vmatprep.subr.bf16.mxu0 0
    %2305 = vmatpush1.bf16.msra.mxu0 %v2147
    %2306 = vmatprep.subr.bf16.mxu0 0
    %2307 = vmatpush1.bf16.msra.mxu0 %v2148
    %2308 = vmatprep.subr.bf16.mxu0 0
    %2309 = vmatpush1.bf16.msra.mxu0 %v2149
    %2310 = vmatprep.subr.bf16.mxu0 0
    %2311 = vmatpush1.bf16.msra.mxu0 %v2150
    %2312 = vmatprep.subr.bf16.mxu0 0
    %2313 = vmatpush1.bf16.msra.mxu0 %v2151
    %2314 = vmatprep.subr.bf16.mxu0 0
    %2315 = vmatpush1.bf16.msra.mxu0 %v2152
    %2316 = vmatprep.subr.bf16.mxu0 0
    %2317 = vmatpush1.bf16.msra.mxu0 %v2153
    %2318 = vmatprep.subr.bf16.mxu0 0
    %2319 = vmatpush1.bf16.msra.mxu0 %v2154
    %2320 = vmatprep.subr.bf16.mxu0 0
    %2321 = vmatpush1.bf16.msra.mxu0 %v2155
    %2322 = vmatprep.subr.bf16.mxu0 0
    %2323 = vmatpush1.bf16.msra.mxu0 %v2156
    %2324 = vmatprep.subr.bf16.mxu0 0
    %2325 = vmatpush1.bf16.msra.mxu0 %v2157
    %2326 = vmatprep.subr.bf16.mxu0 0
    %2327 = vmatpush1.bf16.msra.mxu0 %v2158
    %2328 = vmatprep.mubr.bf16.mxu0 %v1858
    %2329 = vmatmul.mubr.bf16.gmra.mrb[0].mxu0 %v1857
    %v2330 = vpop.f32.mrb[0].mxu0
    %v2331 = vadd.f32 %v2290, %v2330
    %v2332 = vpop.f32.mrb[0].mxu0
    %v2333 = vpop.f32.mrb[0].mxu0
    %v2334 = vadd.f32 %v2293, %v2333
    %v2335 = vpop.f32.mrb[0].mxu0
    %2336 = vdwg.mxu0
    %2337 = vmatprep.subr.bf16.mxu0 0
    %2338 = vmatpush1.bf16.msra.mxu0 %v2159
    %2339 = vmatprep.subr.bf16.mxu0 0
    %2340 = vmatpush1.bf16.msra.mxu0 %v2160
    %2341 = vmatprep.subr.bf16.mxu0 0
    %2342 = vmatpush1.bf16.msra.mxu0 %v2161
    %2343 = vmatprep.subr.bf16.mxu0 0
    %2344 = vmatpush1.bf16.msra.mxu0 %v2162
    %2345 = vmatprep.subr.bf16.mxu0 0
    %2346 = vmatpush1.bf16.msra.mxu0 %v2163
    %2347 = vmatprep.subr.bf16.mxu0 0
    %2348 = vmatpush1.bf16.msra.mxu0 %v2164
    %2349 = vmatprep.subr.bf16.mxu0 0
    %2350 = vmatpush1.bf16.msra.mxu0 %v2165
    %2351 = vmatprep.subr.bf16.mxu0 0
    %2352 = vmatpush1.bf16.msra.mxu0 %v2166
    %2353 = vmatprep.subr.bf16.mxu0 0
    %2354 = vmatpush1.bf16.msra.mxu0 %v2167
    %2355 = vmatprep.subr.bf16.mxu0 0
    %2356 = vmatpush1.bf16.msra.mxu0 %v2168
    %2357 = vmatprep.subr.bf16.mxu0 0
    %2358 = vmatpush1.bf16.msra.mxu0 %v2169
    %2359 = vmatprep.subr.bf16.mxu0 0
    %2360 = vmatpush1.bf16.msra.mxu0 %v2170
    %2361 = vmatprep.subr.bf16.mxu0 0
    %2362 = vmatpush1.bf16.msra.mxu0 %v2171
    %2363 = vmatprep.subr.bf16.mxu0 0
    %2364 = vmatpush1.bf16.msra.mxu0 %v2172
    %2365 = vmatprep.subr.bf16.mxu0 0
    %2366 = vmatpush1.bf16.msra.mxu0 %v2173
    %2367 = vmatprep.subr.bf16.mxu0 0
    %2368 = vmatpush1.bf16.msra.mxu0 %v2174
    %2369 = vmatprep.mubr.bf16.mxu0 %v1860
    %2370 = vmatmul.mubr.bf16.gmra.mrb[0].mxu0 %v1859
    %v2371 = vpop.f32.mrb[0].mxu0
    %v2372 = vadd.f32 %v2331, %v2371
    %v2373 = vpop.f32.mrb[0].mxu0
    %v2374 = vpop.f32.mrb[0].mxu0
    %v2375 = vadd.f32 %v2334, %v2374
    %v2376 = vpop.f32.mrb[0].mxu0
    %2377 = vdwg.mxu0
    %2378 = vmatprep.subr.bf16.mxu0 0
    %2379 = vmatpush1.bf16.msra.mxu0 %v2175
    %2380 = vmatprep.subr.bf16.mxu0 0
    %2381 = vmatpush1.bf16.msra.mxu0 %v2176
    %2382 = vmatprep.subr.bf16.mxu0 0
    %2383 = vmatpush1.bf16.msra.mxu0 %v2177
    %2384 = vmatprep.subr.bf16.mxu0 0
    %2385 = vmatpush1.bf16.msra.mxu0 %v2178
    %2386 = vmatprep.subr.bf16.mxu0 0
    %2387 = vmatpush1.bf16.msra.mxu0 %v2179
    %2388 = vmatprep.subr.bf16.mxu0 0
    %2389 = vmatpush1.bf16.msra.mxu0 %v2180
    %2390 = vmatprep.subr.bf16.mxu0 0
    %2391 = vmatpush1.bf16.msra.mxu0 %v2181
    %2392 = vmatprep.subr.bf16.mxu0 0
    %2393 = vmatpush1.bf16.msra.mxu0 %v2182
    %2394 = vmatprep.subr.bf16.mxu0 0
    %2395 = vmatpush1.bf16.msra.mxu0 %v2183
    %2396 = vmatprep.subr.bf16.mxu0 0
    %2397 = vmatpush1.bf16.msra.mxu0 %v2184
    %2398 = vmatprep.subr.bf16.mxu0 0
    %2399 = vmatpush1.bf16.msra.mxu0 %v2185
    %2400 = vmatprep.subr.bf16.mxu0 0
    %2401 = vmatpush1.bf16.msra.mxu0 %v2186
    %2402 = vmatprep.subr.bf16.mxu0 0
    %2403 = vmatpush1.bf16.msra.mxu0 %v2187
    %2404 = vmatprep.subr.bf16.mxu0 0
    %2405 = vmatpush1.bf16.msra.mxu0 %v2188
    %2406 = vmatprep.subr.bf16.mxu0 0
    %2407 = vmatpush1.bf16.msra.mxu0 %v2189
    %2408 = vmatprep.subr.bf16.mxu0 0
    %2409 = vmatpush1.bf16.msra.mxu0 %v2190
    %2410 = vmatprep.mubr.bf16.mxu0 %v1862
    %2411 = vmatmul.mubr.bf16.gmra.mrb[0].mxu0 %v1861
    %v2412 = vpop.f32.mrb[0].mxu0
    %v2413 = vadd.f32 %v2372, %v2412
    %v2414 = vpop.f32.mrb[0].mxu0
    %v2415 = vpop.f32.mrb[0].mxu0
    %v2416 = vadd.f32 %v2375, %v2415
    %v2417 = vpop.f32.mrb[0].mxu0
    %2418 = vdwg.mxu0
    %v2419 = vpack.c.bf16 %v1695, %v1687
    %v2420 = vpack.c.bf16 %v1696, %v1688
    %v2421 = vpack.c.bf16 %v1697, %v1689
    %v2422 = vpack.c.bf16 %v1698, %v1690
    %v2423 = vpack.c.bf16 %v1699, %v1691
    %v2424 = vpack.c.bf16 %v1700, %v1692
    %v2425 = vpack.c.bf16 %v1701, %v1693
    %v2426 = vpack.c.bf16 %v1702, %v1694
    %2427 = vmatprep.subr.bf16.mxu0 0
    %2428 = vmatpush1.bf16.msra.mxu0 %v2127
    %2429 = vmatprep.subr.bf16.mxu0 0
    %2430 = vmatpush1.bf16.msra.mxu0 %v2128
    %2431 = vmatprep.subr.bf16.mxu0 0
    %2432 = vmatpush1.bf16.msra.mxu0 %v2129
    %2433 = vmatprep.subr.bf16.mxu0 0
    %2434 = vmatpush1.bf16.msra.mxu0 %v2130
    %2435 = vmatprep.subr.bf16.mxu0 0
    %2436 = vmatpush1.bf16.msra.mxu0 %v2131
    %2437 = vmatprep.subr.bf16.mxu0 0
    %2438 = vmatpush1.bf16.msra.mxu0 %v2132
    %2439 = vmatprep.subr.bf16.mxu0 0
    %2440 = vmatpush1.bf16.msra.mxu0 %v2133
    %2441 = vmatprep.subr.bf16.mxu0 0
    %2442 = vmatpush1.bf16.msra.mxu0 %v2134
    %2443 = vmatprep.subr.bf16.mxu0 0
    %2444 = vmatpush1.bf16.msra.mxu0 %v2135
    %2445 = vmatprep.subr.bf16.mxu0 0
    %2446 = vmatpush1.bf16.msra.mxu0 %v2136
    %2447 = vmatprep.subr.bf16.mxu0 0
    %2448 = vmatpush1.bf16.msra.mxu0 %v2137
    %2449 = vmatprep.subr.bf16.mxu0 0
    %2450 = vmatpush1.bf16.msra.mxu0 %v2138
    %2451 = vmatprep.subr.bf16.mxu0 0
    %2452 = vmatpush1.bf16.msra.mxu0 %v2139
    %2453 = vmatprep.subr.bf16.mxu0 0
    %2454 = vmatpush1.bf16.msra.mxu0 %v2140
    %2455 = vmatprep.subr.bf16.mxu0 0
    %2456 = vmatpush1.bf16.msra.mxu0 %v2141
    %2457 = vmatprep.subr.bf16.mxu0 0
    %2458 = vmatpush1.bf16.msra.mxu0 %v2142
    %2459 = vmatprep.mubr.bf16.mxu0 %v2420
    %2460 = vmatmul.mubr.bf16.gmra.mrb[0].mxu0 %v2419
    %v2461 = vpop.f32.mrb[0].mxu0
    %v2462 = vadd.f32 %v1080, %v2461
    %v2463 = vpop.f32.mrb[0].mxu0
    %v2464 = vpop.f32.mrb[0].mxu0
    %v2465 = vadd.f32 %v1081, %v2464
    %v2466 = vpop.f32.mrb[0].mxu0
    %2467 = vdwg.mxu0
    %2468 = vmatprep.subr.bf16.mxu0 0
    %2469 = vmatpush1.bf16.msra.mxu0 %v2143
    %2470 = vmatprep.subr.bf16.mxu0 0
    %2471 = vmatpush1.bf16.msra.mxu0 %v2144
    %2472 = vmatprep.subr.bf16.mxu0 0
    %2473 = vmatpush1.bf16.msra.mxu0 %v2145
    %2474 = vmatprep.subr.bf16.mxu0 0
    %2475 = vmatpush1.bf16.msra.mxu0 %v2146
    %2476 = vmatprep.subr.bf16.mxu0 0
    %2477 = vmatpush1.bf16.msra.mxu0 %v2147
    %2478 = vmatprep.subr.bf16.mxu0 0
    %2479 = vmatpush1.bf16.msra.mxu0 %v2148
    %2480 = vmatprep.subr.bf16.mxu0 0
    %2481 = vmatpush1.bf16.msra.mxu0 %v2149
    %2482 = vmatprep.subr.bf16.mxu0 0
    %2483 = vmatpush1.bf16.msra.mxu0 %v2150
    %2484 = vmatprep.subr.bf16.mxu0 0
    %2485 = vmatpush1.bf16.msra.mxu0 %v2151
    %2486 = vmatprep.subr.bf16.mxu0 0
    %2487 = vmatpush1.bf16.msra.mxu0 %v2152
    %2488 = vmatprep.subr.bf16.mxu0 0
    %2489 = vmatpush1.bf16.msra.mxu0 %v2153
    %2490 = vmatprep.subr.bf16.mxu0 0
    %2491 = vmatpush1.bf16.msra.mxu0 %v2154
    %2492 = vmatprep.subr.bf16.mxu0 0
    %2493 = vmatpush1.bf16.msra.mxu0 %v2155
    %2494 = vmatprep.subr.bf16.mxu0 0
    %2495 = vmatpush1.bf16.msra.mxu0 %v2156
    %2496 = vmatprep.subr.bf16.mxu0 0
    %2497 = vmatpush1.bf16.msra.mxu0 %v2157
    %2498 = vmatprep.subr.bf16.mxu0 0
    %2499 = vmatpush1.bf16.msra.mxu0 %v2158
    %2500 = vmatprep.mubr.bf16.mxu0 %v2422
    %2501 = vmatmul.mubr.bf16.gmra.mrb[0].mxu0 %v2421
    %v2502 = vpop.f32.mrb[0].mxu0
    %v2503 = vadd.f32 %v2462, %v2502
    %v2504 = vpop.f32.mrb[0].mxu0
    %v2505 = vpop.f32.mrb[0].mxu0
    %v2506 = vadd.f32 %v2465, %v2505
    %v2507 = vpop.f32.mrb[0].mxu0
    %2508 = vdwg.mxu0
    %2509 = vmatprep.subr.bf16.mxu0 0
    %2510 = vmatpush1.bf16.msra.mxu0 %v2159
    %2511 = vmatprep.subr.bf16.mxu0 0
    %2512 = vmatpush1.bf16.msra.mxu0 %v2160
    %2513 = vmatprep.subr.bf16.mxu0 0
    %2514 = vmatpush1.bf16.msra.mxu0 %v2161
    %2515 = vmatprep.subr.bf16.mxu0 0
    %2516 = vmatpush1.bf16.msra.mxu0 %v2162
    %2517 = vmatprep.subr.bf16.mxu0 0
    %2518 = vmatpush1.bf16.msra.mxu0 %v2163
    %2519 = vmatprep.subr.bf16.mxu0 0
    %2520 = vmatpush1.bf16.msra.mxu0 %v2164
    %2521 = vmatprep.subr.bf16.mxu0 0
    %2522 = vmatpush1.bf16.msra.mxu0 %v2165
    %2523 = vmatprep.subr.bf16.mxu0 0
    %2524 = vmatpush1.bf16.msra.mxu0 %v2166
    %2525 = vmatprep.subr.bf16.mxu0 0
    %2526 = vmatpush1.bf16.msra.mxu0 %v2167
    %2527 = vmatprep.subr.bf16.mxu0 0
    %2528 = vmatpush1.bf16.msra.mxu0 %v2168
    %2529 = vmatprep.subr.bf16.mxu0 0
    %2530 = vmatpush1.bf16.msra.mxu0 %v2169
    %2531 = vmatprep.subr.bf16.mxu0 0
    %2532 = vmatpush1.bf16.msra.mxu0 %v2170
    %2533 = vmatprep.subr.bf16.mxu0 0
    %2534 = vmatpush1.bf16.msra.mxu0 %v2171
    %2535 = vmatprep.subr.bf16.mxu0 0
    %2536 = vmatpush1.bf16.msra.mxu0 %v2172
    %2537 = vmatprep.subr.bf16.mxu0 0
    %2538 = vmatpush1.bf16.msra.mxu0 %v2173
    %2539 = vmatprep.subr.bf16.mxu0 0
    %2540 = vmatpush1.bf16.msra.mxu0 %v2174
    %2541 = vmatprep.mubr.bf16.mxu0 %v2424
    %2542 = vmatmul.mubr.bf16.gmra.mrb[0].mxu0 %v2423
    %v2543 = vpop.f32.mrb[0].mxu0
    %v2544 = vadd.f32 %v2503, %v2543
    %v2545 = vpop.f32.mrb[0].mxu0
    %v2546 = vpop.f32.mrb[0].mxu0
    %v2547 = vadd.f32 %v2506, %v2546
    %v2548 = vpop.f32.mrb[0].mxu0
    %2549 = vdwg.mxu0
    %2550 = vmatprep.subr.bf16.mxu0 0
    %2551 = vmatpush1.bf16.msra.mxu0 %v2175
    %2552 = vmatprep.subr.bf16.mxu0 0
    %2553 = vmatpush1.bf16.msra.mxu0 %v2176
    %2554 = vmatprep.subr.bf16.mxu0 0
    %2555 = vmatpush1.bf16.msra.mxu0 %v2177
    %2556 = vmatprep.subr.bf16.mxu0 0
    %2557 = vmatpush1.bf16.msra.mxu0 %v2178
    %2558 = vmatprep.subr.bf16.mxu0 0
    %2559 = vmatpush1.bf16.msra.mxu0 %v2179
    %2560 = vmatprep.subr.bf16.mxu0 0
    %2561 = vmatpush1.bf16.msra.mxu0 %v2180
    %2562 = vmatprep.subr.bf16.mxu0 0
    %2563 = vmatpush1.bf16.msra.mxu0 %v2181
    %2564 = vmatprep.subr.bf16.mxu0 0
    %2565 = vmatpush1.bf16.msra.mxu0 %v2182
    %2566 = vmatprep.subr.bf16.mxu0 0
    %2567 = vmatpush1.bf16.msra.mxu0 %v2183
    %2568 = vmatprep.subr.bf16.mxu0 0
    %2569 = vmatpush1.bf16.msra.mxu0 %v2184
    %2570 = vmatprep.subr.bf16.mxu0 0
    %2571 = vmatpush1.bf16.msra.mxu0 %v2185
    %2572 = vmatprep.subr.bf16.mxu0 0
    %2573 = vmatpush1.bf16.msra.mxu0 %v2186
    %2574 = vmatprep.subr.bf16.mxu0 0
    %2575 = vmatpush1.bf16.msra.mxu0 %v2187
    %2576 = vmatprep.subr.bf16.mxu0 0
    %2577 = vmatpush1.bf16.msra.mxu0 %v2188
    %2578 = vmatprep.subr.bf16.mxu0 0
    %2579 = vmatpush1.bf16.msra.mxu0 %v2189
    %2580 = vmatprep.subr.bf16.mxu0 0
    %2581 = vmatpush1.bf16.msra.mxu0 %v2190
    %2582 = vmatprep.mubr.bf16.mxu0 %v2426
    %2583 = vmatmul.mubr.bf16.gmra.mrb[0].mxu0 %v2425
    %v2584 = vpop.f32.mrb[0].mxu0
    %v2585 = vadd.f32 %v2544, %v2584
    %v2586 = vpop.f32.mrb[0].mxu0
    %v2587 = vpop.f32.mrb[0].mxu0
    %v2588 = vadd.f32 %v2547, %v2587
    %v2589 = vpop.f32.mrb[0].mxu0
    %2590 = vdwg.mxu0
    %vm2591 = vcmp.gt.f32.partialorder %v2413, 0.0
    %vm2592 = vcmp.gt.f32.partialorder %v2416, 0.0
    %v2593 = vmul.f32 %v2413, 0.2
    %v2594 = vmul.f32 %v2416, 0.2
    %v2595 = vsel %vm2591, %v2413, %v2593
    %v2596 = vsel %vm2592, %v2416, %v2594
    %vm2597 = vcmp.gt.f32.partialorder %v2585, 0.0
    %vm2598 = vcmp.gt.f32.partialorder %v2588, 0.0
    %v2599 = vmul.f32 %v2585, 0.2
    %v2600 = vmul.f32 %v2588, 0.2
    %v2601 = vsel %vm2597, %v2585, %v2599
    %v2602 = vsel %vm2598, %v2588, %v2600
    %v2603 = vld [vmem:[%s8] sm:$0x1]
    %v2604 = vld [vmem:[#allocation2] sm:$0x1]
    %v2606 = vlaneseq
    %v2607 = vshrl.u32 %v2606, 7
    %v2608 = vsub.s32 0, %v2607
    %v2609 = vrot.slane %v2603, %v2608
    %v2611 = vmul.f32 %v2595, %v2609
    %v2612 = vmul.f32 %v2596, %v2609
    %2613 = vadd.xlane.f32.xlu0 %v2611
    %v2614 = vpop.xlane.xlu0 %2613
    %2615 = vadd.xlane.f32.xlu0 %v2612
    %v2616 = vpop.xlane.xlu0 %2615
    %v2618 = vlaneseq
    %v2619 = vshrl.u32 %v2618, 7
    %v2620 = vsub.s32 0, %v2619
    %v2621 = vrot.slane %v2604, %v2620
    %v2623 = vadd.f32 %v2614, %v2621
    %v2624 = vadd.f32 %v2616, %v2621
    %vm2625 = vcmask 7168
    %2626 = vst.msk [vmem:[%s10] sm:$0xff] %vm2625, %v2623
    %2627 = vst.msk [vmem:[%s10 + $0x8] sm:$0xff] %vm2625, %v2624
    %v2628 = vmul.f32 %v2601, %v2609
    %v2629 = vmul.f32 %v2602, %v2609
    %2630 = vadd.xlane.f32.xlu0 %v2628
    %v2631 = vpop.xlane.xlu0 %2630
    %2632 = vadd.xlane.f32.xlu0 %v2629
    %v2633 = vpop.xlane.xlu0 %2632
    %v2634 = vadd.f32 %v2631, %v2621
    %v2635 = vadd.f32 %v2633, %v2621
    %2636 = vst.msk [vmem:[%s11] sm:$0xff] %vm2625, %v2634
    %2637 = vst.msk [vmem:[%s11 + $0x8] sm:$0xff] %vm2625, %v2635
    // Predicated region
    $region50: #{cgan_forward.1} parent=1 // pred_check
      _
    $region51: #{cgan_forward.1} parent=1 // pred_check_branch
      %2639 = sbr.rel (0) target = $region53
    $region52: #{cgan_forward.1} parent=1 // pred_region
      _
    $region53: #{cgan_forward.1} parent=1 // pred_fallthru
      _
    // Predicated region
    $region54: #{cgan_forward.1} parent=1 // pred_check
      _
    $region55: #{cgan_forward.1} parent=1 // pred_check_branch
      %2641 = sbr.rel (0) target = $region57
    $region56: #{cgan_forward.1} parent=1 // pred_region
      _
    $region57: #{cgan_forward.1} parent=1 // pred_fallthru
      _
    // Predicated region
    $region58: #{cgan_forward.1} parent=1 // pred_check
      _
    $region59: #{cgan_forward.1} parent=1 // pred_check_branch
      %2643 = sbr.rel (0) target = $region61
    $region60: #{cgan_forward.1} parent=1 // pred_region
      _
    $region61: #{cgan_forward.1} parent=1 // pred_fallthru
      _
    // Predicated region
    $region62: #{cgan_forward.1} parent=1 // pred_check
      _
    $region63: #{cgan_forward.1} parent=1 // pred_check_branch
      %2645 = sbr.rel (0) target = $region65
    $region64: #{cgan_forward.1} parent=1 // pred_region
      _
    $region65: #{cgan_forward.1} parent=1 // pred_fallthru
      _
    %2646 = vsyncpa [#allocation4], 1
    %2647 = vsyncpa [#allocation6], 1

</llo_original>
